<compile_context>
chip_gen: v5e
topology: v5e:2x2
jax: 0.10.0
libtpu: 0.0.40
codegen_flags: <defaults>
</compile_context>

<pallas_src>
import numpy as np
import jax
import jax.numpy as jnp
from jax.experimental import pallas as pl
from jax.experimental.pallas import tpu as pltpu


# ----------------------------------------------------------------------------
# helpers
# ----------------------------------------------------------------------------
def _itemsize(dt):
    return jnp.dtype(dt).itemsize


def _images_per_chunk(n_imgs, tokens_per_img, target_rows=512):
    """Largest divisor k of n_imgs with k * tokens_per_img <= target_rows (k>=1)."""
    k = max(1, min(n_imgs, target_rows // max(tokens_per_img, 1)))
    while n_imgs % k:
        k -= 1
    return k


# ----------------------------------------------------------------------------
# Pallas kernels (fused)
# ----------------------------------------------------------------------------
def _fused_embed_kernel(x_ref, w1_ref, b1_ref, pos_ref,
                        g_ref, bt_ref, w2_ref, b2_ref, dpos_ref, o_ref):
    # patch-embed matmul (bf16 MXU, f32 acc) + bias + pos
    h = jnp.dot(x_ref[0], w1_ref[...], preferred_element_type=jnp.float32)
    h = h + b1_ref[...] + pos_ref[...]
    # LayerNorm(norm) -- f32 statistics
    mu = jnp.mean(h, axis=-1, keepdims=True)
    var = jnp.mean((h - mu) ** 2, axis=-1, keepdims=True)
    y = (h - mu) * jax.lax.rsqrt(var + 1e-5) * g_ref[...] + bt_ref[...]
    # decoder_embed matmul + bias + decoder pos
    z = jnp.dot(y.astype(w2_ref.dtype), w2_ref[...],
                preferred_element_type=jnp.float32)
    o_ref[0] = (z + b2_ref[...] + dpos_ref[...]).astype(o_ref.dtype)


def _ln_pred_kernel(x_ref, g_ref, bt_ref, w_ref, b_ref, o_ref):
    # decoder_norm (LayerNorm, f32 stats) -> decoder_pred matmul + bias
    x = x_ref[0].astype(jnp.float32)
    mu = jnp.mean(x, axis=-1, keepdims=True)
    var = jnp.mean((x - mu) ** 2, axis=-1, keepdims=True)
    y = (x - mu) * jax.lax.rsqrt(var + 1e-5) * g_ref[...] + bt_ref[...]
    acc = jnp.dot(y.astype(w_ref.dtype), w_ref[...],
                  preferred_element_type=jnp.float32)
    o_ref[0] = (acc + b_ref[...]).astype(o_ref.dtype)


# ----------------------------------------------------------------------------
# Pallas wrappers
# ----------------------------------------------------------------------------
def fused_patch_to_decoder_embed(patches, w1, b1, pos_tile, gamma, beta,
                                 w2, b2, dpos_tile, out_dtype=jnp.bfloat16):
    """patch_embed + pos  ->  LayerNorm  ->  decoder_embed + dec_pos, fused.

    patches: (Gc, TL, K) bf16 row chunks; pos_tile/dpos_tile: (TL, E)/(TL, Dd).
    Returns (Gc, TL, Dd) in out_dtype (bf16 intermediate by default).
    """
    Gc, TL, K = patches.shape
    K2, E = w1.shape
    E2, Dd = w2.shape
    assert K == K2 and E == E2
    assert pos_tile.shape == (TL, E) and dpos_tile.shape == (TL, Dd)
    cost = pl.CostEstimate(
        flops=int(2 * Gc * TL * (K * E + E * Dd)),
        transcendentals=int(Gc * TL),
        bytes_accessed=int(patches.size * _itemsize(patches.dtype)
                           + w1.size * _itemsize(w1.dtype)
                           + w2.size * _itemsize(w2.dtype)
                           + (TL * E + TL * Dd + 3 * E + Dd) * 4
                           + Gc * TL * Dd * _itemsize(out_dtype)))
    return pl.pallas_call(
        _fused_embed_kernel,
        out_shape=jax.ShapeDtypeStruct((Gc, TL, Dd), out_dtype),
        grid=(Gc,),
        in_specs=[
            pl.BlockSpec((1, TL, K), lambda i: (i, 0, 0)),    # patches (row chunk)
            pl.BlockSpec((K, E), lambda i: (0, 0)),           # patch_w (resident)
            pl.BlockSpec((1, E), lambda i: (0, 0)),           # patch_b
            pl.BlockSpec((TL, E), lambda i: (0, 0)),          # pos tile (resident)
            pl.BlockSpec((1, E), lambda i: (0, 0)),           # norm gamma
            pl.BlockSpec((1, E), lambda i: (0, 0)),           # norm beta
            pl.BlockSpec((E, Dd), lambda i: (0, 0)),          # dec_embed_w (resident)
            pl.BlockSpec((1, Dd), lambda i: (0, 0)),          # dec_embed_b
            pl.BlockSpec((TL, Dd), lambda i: (0, 0)),         # decoder pos tile
        ],
        out_specs=pl.BlockSpec((1, TL, Dd), lambda i: (i, 0, 0)),
        compiler_params=pltpu.CompilerParams(
            dimension_semantics=("parallel",),
            vmem_limit_bytes=32 * 1024 * 1024),
        cost_estimate=cost,
    )(patches, w1, b1.reshape(1, E), pos_tile,
      gamma.reshape(1, E), beta.reshape(1, E),
      w2, b2.reshape(1, Dd), dpos_tile)


def fused_ln_pred(xt, gamma, beta, w, b, n_chunks, out_dtype=jnp.float32):
    """decoder_norm -> decoder_pred on the first `n_chunks` row chunks of xt.

    xt: (Gc, TL, Dd).  Only chunks [0, n_chunks) are read (RGB stream); the
    selection is done by the grid / index_map, no host-side slice+reshape copy.
    """
    Gc, TL, Dd = xt.shape
    Dd2, N = w.shape
    assert Dd == Dd2 and 1 <= n_chunks <= Gc
    cost = pl.CostEstimate(
        flops=int(2 * n_chunks * TL * Dd * N),
        transcendentals=int(n_chunks * TL),
        bytes_accessed=int(n_chunks * TL * Dd * _itemsize(xt.dtype)
                           + w.size * _itemsize(w.dtype)
                           + (2 * Dd + N) * 4
                           + n_chunks * TL * N * _itemsize(out_dtype)))
    return pl.pallas_call(
        _ln_pred_kernel,
        out_shape=jax.ShapeDtypeStruct((n_chunks, TL, N), out_dtype),
        grid=(n_chunks,),
        in_specs=[
            pl.BlockSpec((1, TL, Dd), lambda i: (i, 0, 0)),
            pl.BlockSpec((1, Dd), lambda i: (0, 0)),
            pl.BlockSpec((1, Dd), lambda i: (0, 0)),
            pl.BlockSpec((Dd, N), lambda i: (0, 0)),
            pl.BlockSpec((1, N), lambda i: (0, 0)),
        ],
        out_specs=pl.BlockSpec((1, TL, N), lambda i: (i, 0, 0)),
        compiler_params=pltpu.CompilerParams(
            dimension_semantics=("parallel",),
            vmem_limit_bytes=32 * 1024 * 1024),
        cost_estimate=cost,
    )(xt, gamma.reshape(1, Dd), beta.reshape(1, Dd), w, b.reshape(1, N))


# ----------------------------------------------------------------------------
# Parameter construction (deterministic, synthetic)
# ----------------------------------------------------------------------------
def get_2d_sincos_pos_embed(embed_dim, grid_size, cls_token=False):
    def sincos_1d(dim, pos):
        omega = np.arange(dim // 2, dtype=np.float64) / (dim / 2.0)
        omega = 1.0 / 10000.0 ** omega
        out = np.einsum("m,d->md", pos.reshape(-1), omega)
        return np.concatenate([np.sin(out), np.cos(out)], axis=1)

    grid_h = np.arange(grid_size, dtype=np.float32)
    grid_w = np.arange(grid_size, dtype=np.float32)
    grid = np.meshgrid(grid_w, grid_h)
    grid = np.stack(grid, axis=0).reshape([2, -1])
    emb_h = sincos_1d(embed_dim // 2, grid[0])
    emb_w = sincos_1d(embed_dim // 2, grid[1])
    pos = np.concatenate([emb_h, emb_w], axis=1)
    if cls_token:
        pos = np.concatenate([np.zeros([1, embed_dim]), pos], axis=0)
    return pos.astype(np.float32)


def init_params(key, patch_size=16, in_chans=3, embed_dim=128, dec_dim=128):
    k = jax.random.split(key, 4)
    kdim = in_chans * patch_size * patch_size
    params = {
        # PatchEmbed.proj : Conv2d(in_chans, embed_dim, k=p, s=p)
        # stored pre-reshaped as (C*p*p, E), flatten order (c, ph, pw);
        # matmul weights in bf16 (MXU operands), biases / LN params in f32.
        "patch_w": (jax.random.normal(k[0], (kdim, embed_dim), jnp.float32)
                    * (1.0 / np.sqrt(kdim))).astype(jnp.bfloat16),
        "patch_b": jnp.zeros((embed_dim,), jnp.float32),
        "pos_embed": jnp.asarray(
            get_2d_sincos_pos_embed(embed_dim, 14, cls_token=True))[None],
        "norm_g": jnp.ones((embed_dim,), jnp.float32),
        "norm_b": jnp.zeros((embed_dim,), jnp.float32),
        "dec_embed_w": (jax.random.normal(k[1], (embed_dim, dec_dim), jnp.float32)
                        * (1.0 / np.sqrt(embed_dim))).astype(jnp.bfloat16),
        "dec_embed_b": jnp.zeros((dec_dim,), jnp.float32),
        "dec_pos_embed": jnp.asarray(
            get_2d_sincos_pos_embed(dec_dim, 14, cls_token=True))[None],
        "dec_norm_g": jnp.ones((dec_dim,), jnp.float32),
        "dec_norm_b": jnp.zeros((dec_dim,), jnp.float32),
        "dec_pred_w": (jax.random.normal(k[2], (dec_dim, kdim), jnp.float32)
                       * (1.0 / np.sqrt(dec_dim))).astype(jnp.bfloat16),
        "dec_pred_b": jnp.zeros((kdim,), jnp.float32),
    }
    return params


# ----------------------------------------------------------------------------
# Forward (glue in plain JAX, hot paths in fused Pallas kernels)
# ----------------------------------------------------------------------------
def interp_pos_embed(pos_embed, W, H):
    """pos_embed[:, 1:, :] -> (1,14,14,D) -> permute -> bilinear to (W,H) -> (W*H, D).
    antialias=False to match torch F.interpolate(mode='bilinear')."""
    assert pos_embed.shape[1] == 14 * 14 + 1, "pos embed must be a 14x14 grid + cls"
    D = pos_embed.shape[-1]
    pos = pos_embed[0, 1:, :].reshape(14, 14, D).transpose(2, 0, 1)[None]  # 1,D,14,14
    pos = jax.image.resize(pos, (1, D, W, H), method="bilinear", antialias=False)
    pos = pos.reshape(1, D, W * H).transpose(0, 2, 1)                      # 1, W*H, D
    return pos[0].astype(jnp.float32)                                      # (W*H, D)


def patchify_for_conv(imgs, p, dtype):
    """NCHW -> (B, L, C*p*p) flatten order (c, ph, pw); cast rides on the transpose."""
    B, C, Hi, Wi = imgs.shape
    H, W = Hi // p, Wi // p
    x = imgs.reshape(B, C, H, p, W, p)
    x = x.transpose(0, 2, 4, 1, 3, 5).astype(dtype)   # B, H, W, C, p, p
    return x.reshape(B, H * W, C * p * p)


def unpatchify(tokens, H, W, p, c=3):
    """(B, L, p*p*c) -> (B, c, H*p, W*p) using MAE's nhwpqc ordering."""
    B = tokens.shape[0]
    x = tokens.reshape(B, H, W, p, p, c)
    x = x.transpose(0, 5, 1, 3, 2, 4)                 # B, c, h, p, w, p
    return x.reshape(B, c, H * p, W * p)


def mae_forward(params, img_rgb, img_t, patch_size=16):
    p = patch_size
    B, C, Hi, Wi = img_rgb.shape
    H, W = Hi // p, Wi // p
    L = H * W
    K = params["patch_w"].shape[0]
    E = params["patch_w"].shape[1]
    Dd = params["dec_embed_w"].shape[1]
    Np = params["dec_pred_w"].shape[1]

    # TODO(synk): config['upsample'] 2x bilinear pre-upsample omitted (config not provided).

    # ---- patch extraction: one transpose+cast copy per stream, then regroup ----
    # Both streams are stacked ([rgb ; thermal]) and regrouped into chunks of
    # k images (k | B), giving large MXU-aligned row tiles TL = k*L.
    G = 2 * B
    k = _images_per_chunk(B, L)            # images per row chunk
    Gc = G // k                            # number of row chunks (grid size)
    TL = k * L                             # rows per chunk
    patches = jnp.concatenate(
        [patchify_for_conv(img_rgb, p, jnp.bfloat16),
         patchify_for_conv(img_t, p, jnp.bfloat16)], axis=0)   # (2B, L, K) bf16
    patches = patches.reshape(Gc, TL, K)

    # ---- interpolated sin-cos pos embeddings, tiled to chunk height (tiny) ----
    pos = interp_pos_embed(params["pos_embed"], W, H)           # (L, E)
    dpos = interp_pos_embed(params["dec_pos_embed"], W, H)      # (L, Dd)
    pos_tile = jnp.tile(pos, (k, 1))                            # (TL, E)
    dpos_tile = jnp.tile(dpos, (k, 1))                          # (TL, Dd)

    # ---- fused K1+K2: patch_embed + pos -> norm -> decoder_embed + dec pos ----
    # TODO(synk): encoder/decoder transformer Blocks, Relative_Position_Layer,
    # BiMixtureOfAdapters, ConvFusionLayer omitted (definitions not provided).
    xt = fused_patch_to_decoder_embed(
        patches, params["patch_w"], params["patch_b"], pos_tile,
        params["norm_g"], params["norm_b"],
        params["dec_embed_w"], params["dec_embed_b"], dpos_tile,
        out_dtype=jnp.bfloat16)                                 # (Gc, TL, Dd) bf16

    # ---- K3: decoder_norm -> decoder_pred, RGB stream only (grid-selected) ----
    n_rgb_chunks = B // k
    pred_tok = fused_ln_pred(xt, params["dec_norm_g"], params["dec_norm_b"],
                             params["dec_pred_w"], params["dec_pred_b"],
                             n_chunks=n_rgb_chunks)             # (B//k, TL, Np) f32
    pred_tok = pred_tok.reshape(B, L, Np)
    pred_img = unpatchify(pred_tok, H, W, p, c=3)               # (B, 3, Hi, Wi)

    # TODO(synk): forward_loss_split (SSIM / MEF_MSSSIM / MaxGradLoss /
    # PixelLoss / prompt losses) omitted — loss modules not provided.
    return pred_img


# ----------------------------------------------------------------------------
if __name__ == "__main__":
    key = jax.random.PRNGKey(0)
    k_img, k_t, k_par = jax.random.split(key, 3)

    # small shapes: batch=2, 3 channels, 64x64 image, patch 16 -> 4x4=16 tokens
    # embed_dim / dec_dim = 128 (lane-dense), kdim = 3*16*16 = 768
    B, C, S, P = 2, 3, 64, 16
    img_rgb = jax.random.normal(k_img, (B, C, S, S), jnp.float32)
    img_t = jax.random.normal(k_t, (B, C, S, S), jnp.float32)

    params = init_params(k_par, patch_size=P, in_chans=C,
                         embed_dim=128, dec_dim=128)

    fwd = jax.jit(mae_forward, static_argnames=("patch_size",))
    pred = fwd(params, img_rgb, img_t, patch_size=P)
    pred = jax.block_until_ready(pred)
    assert pred.shape == (B, C, S, S) and bool(jnp.all(jnp.isfinite(pred)))
    print("KERNEL_OK")
</pallas_src>

<mosaic_0001>
module attributes {stable_mosaic.version = 11 : i64} {
  func.func @_fused_embed_kernel(%arg0: i32, %arg1: memref<1x32x768xbf16, #tpu.memory_space<vmem>>, %arg2: memref<768x128xbf16, #tpu.memory_space<vmem>>, %arg3: memref<1x128xf32, #tpu.memory_space<vmem>>, %arg4: memref<32x128xf32, #tpu.memory_space<vmem>>, %arg5: memref<1x128xf32, #tpu.memory_space<vmem>>, %arg6: memref<1x128xf32, #tpu.memory_space<vmem>>, %arg7: memref<128x128xbf16, #tpu.memory_space<vmem>>, %arg8: memref<1x128xf32, #tpu.memory_space<vmem>>, %arg9: memref<32x128xf32, #tpu.memory_space<vmem>>, %arg10: memref<1x32x128xbf16, #tpu.memory_space<vmem>>) attributes {dimension_semantics = [#tpu.dimension_semantics<parallel>], iteration_bounds = array<i64: 2>, scalar_prefetch = 0 : i64, scratch_operands = 0 : i64, tpu.core_type = #tpu.core_type<tc>, window_params = [{transform_indices = @transform_0, window_bounds = array<i64: 1, 32, 768>}, {pipeline_mode = #tpu.pipeline_mode<synchronous>, transform_indices = @transform_1, window_bounds = array<i64: 768, 128>}, {pipeline_mode = #tpu.pipeline_mode<synchronous>, transform_indices = @transform_2, window_bounds = array<i64: 1, 128>}, {pipeline_mode = #tpu.pipeline_mode<synchronous>, transform_indices = @transform_3, window_bounds = array<i64: 32, 128>}, {pipeline_mode = #tpu.pipeline_mode<synchronous>, transform_indices = @transform_4, window_bounds = array<i64: 1, 128>}, {pipeline_mode = #tpu.pipeline_mode<synchronous>, transform_indices = @transform_5, window_bounds = array<i64: 1, 128>}, {pipeline_mode = #tpu.pipeline_mode<synchronous>, transform_indices = @transform_6, window_bounds = array<i64: 128, 128>}, {pipeline_mode = #tpu.pipeline_mode<synchronous>, transform_indices = @transform_7, window_bounds = array<i64: 1, 128>}, {pipeline_mode = #tpu.pipeline_mode<synchronous>, transform_indices = @transform_8, window_bounds = array<i64: 32, 128>}, {transform_indices = @transform_9, window_bounds = array<i64: 1, 32, 128>}]} {
    %c0 = arith.constant 0 : index
    %c0_0 = arith.constant 0 : index
    %c0_1 = arith.constant 0 : index
    %0 = vector.load %arg1[%c0, %c0_0, %c0_1] : memref<1x32x768xbf16, #tpu.memory_space<vmem>>, vector<1x32x768xbf16>
    %1 = vector.shape_cast %0 : vector<1x32x768xbf16> to vector<32x768xbf16>
    %c0_2 = arith.constant 0 : index
    %c0_3 = arith.constant 0 : index
    %2 = vector.load %arg2[%c0_2, %c0_3] : memref<768x128xbf16, #tpu.memory_space<vmem>>, vector<768x128xbf16>
    %cst = arith.constant dense<0.000000e+00> : vector<32x128xf32>
    %3 = tpu.matmul %1, %2, %cst {dimension_numbers = #tpu.dot_dimension_numbers<[1], [0], [0], [1], [0, 0, 1, 1], [], []>} : vector<32x768xbf16>, vector<768x128xbf16>, vector<32x128xf32> -> vector<32x128xf32>
    %c0_4 = arith.constant 0 : index
    %c0_5 = arith.constant 0 : index
    %4 = vector.load %arg3[%c0_4, %c0_5] : memref<1x128xf32, #tpu.memory_space<vmem>>, vector<1x128xf32>
    %5 = vector.broadcast %4 : vector<1x128xf32> to vector<32x128xf32>
    %6 = arith.addf %3, %5 : vector<32x128xf32>
    %c0_6 = arith.constant 0 : index
    %c0_7 = arith.constant 0 : index
    %7 = vector.load %arg4[%c0_6, %c0_7] : memref<32x128xf32, #tpu.memory_space<vmem>>, vector<32x128xf32>
    %8 = arith.addf %6, %7 : vector<32x128xf32>
    %cst_8 = arith.constant dense<0.000000e+00> : vector<32xf32>
    %9 = vector.multi_reduction <add>, %8, %cst_8 [1] : vector<32x128xf32> to vector<32xf32>
    %10 = vector.shape_cast %9 : vector<32xf32> to vector<32x1xf32>
    %cst_9 = arith.constant 1.280000e+02 : f32
    %11 = vector.broadcast %cst_9 : f32 to vector<32x1xf32>
    %12 = arith.divf %10, %11 : vector<32x1xf32>
    %13 = vector.broadcast %12 : vector<32x1xf32> to vector<32x128xf32>
    %14 = arith.subf %8, %13 : vector<32x128xf32>
    %15 = arith.mulf %14, %14 : vector<32x128xf32>
    %cst_10 = arith.constant dense<0.000000e+00> : vector<32xf32>
    %16 = vector.multi_reduction <add>, %15, %cst_10 [1] : vector<32x128xf32> to vector<32xf32>
    %17 = vector.shape_cast %16 : vector<32xf32> to vector<32x1xf32>
    %cst_11 = arith.constant 1.280000e+02 : f32
    %18 = vector.broadcast %cst_11 : f32 to vector<32x1xf32>
    %19 = arith.divf %17, %18 : vector<32x1xf32>
    %20 = vector.broadcast %12 : vector<32x1xf32> to vector<32x128xf32>
    %21 = arith.subf %8, %20 : vector<32x128xf32>
    %cst_12 = arith.constant 9.99999974E-6 : f32
    %22 = vector.broadcast %cst_12 : f32 to vector<32x1xf32>
    %23 = arith.addf %19, %22 : vector<32x1xf32>
    %24 = math.rsqrt %23 : vector<32x1xf32>
    %25 = vector.broadcast %24 : vector<32x1xf32> to vector<32x128xf32>
    %26 = arith.mulf %21, %25 : vector<32x128xf32>
    %c0_13 = arith.constant 0 : index
    %c0_14 = arith.constant 0 : index
    %27 = vector.load %arg5[%c0_13, %c0_14] : memref<1x128xf32, #tpu.memory_space<vmem>>, vector<1x128xf32>
    %28 = vector.broadcast %27 : vector<1x128xf32> to vector<32x128xf32>
    %29 = arith.mulf %26, %28 : vector<32x128xf32>
    %c0_15 = arith.constant 0 : index
    %c0_16 = arith.constant 0 : index
    %30 = vector.load %arg6[%c0_15, %c0_16] : memref<1x128xf32, #tpu.memory_space<vmem>>, vector<1x128xf32>
    %31 = vector.broadcast %30 : vector<1x128xf32> to vector<32x128xf32>
    %32 = arith.addf %29, %31 : vector<32x128xf32>
    %33 = arith.truncf %32 : vector<32x128xf32> to vector<32x128xbf16>
    %c0_17 = arith.constant 0 : index
    %c0_18 = arith.constant 0 : index
    %34 = vector.load %arg7[%c0_17, %c0_18] : memref<128x128xbf16, #tpu.memory_space<vmem>>, vector<128x128xbf16>
    %cst_19 = arith.constant dense<0.000000e+00> : vector<32x128xf32>
    %35 = tpu.matmul %33, %34, %cst_19 {dimension_numbers = #tpu.dot_dimension_numbers<[1], [0], [0], [1], [0, 0, 1, 1], [], []>} : vector<32x128xbf16>, vector<128x128xbf16>, vector<32x128xf32> -> vector<32x128xf32>
    %c0_20 = arith.constant 0 : index
    %c0_21 = arith.constant 0 : index
    %36 = vector.load %arg8[%c0_20, %c0_21] : memref<1x128xf32, #tpu.memory_space<vmem>>, vector<1x128xf32>
    %37 = vector.broadcast %36 : vector<1x128xf32> to vector<32x128xf32>
    %38 = arith.addf %35, %37 : vector<32x128xf32>
    %c0_22 = arith.constant 0 : index
    %c0_23 = arith.constant 0 : index
    %39 = vector.load %arg9[%c0_22, %c0_23] : memref<32x128xf32, #tpu.memory_space<vmem>>, vector<32x128xf32>
    %40 = arith.addf %38, %39 : vector<32x128xf32>
    %41 = arith.truncf %40 : vector<32x128xf32> to vector<32x128xbf16>
    %c0_24 = arith.constant 0 : index
    %c0_25 = arith.constant 0 : index
    %c0_26 = arith.constant 0 : index
    %42 = vector.load %arg10[%c0_24, %c0_25, %c0_26] : memref<1x32x128xbf16, #tpu.memory_space<vmem>>, vector<1x32x128xbf16>
    %43 = vector.shape_cast %42 : vector<1x32x128xbf16> to vector<32x128xbf16>
    %44 = vector.shape_cast %41 : vector<32x128xbf16> to vector<1x32x128xbf16>
    tpu.vector_store %arg10[%c0_24, %c0_25, %c0_26], %44 {strides = array<i32>} : memref<1x32x128xbf16, #tpu.memory_space<vmem>>, vector<1x32x128xbf16>,
    return
  }
  func.func @transform_0(%arg0: i32) -> (i32, i32, i32) {
    %c0_i32 = arith.constant 0 : i32
    %c0_i32_0 = arith.constant 0 : i32
    %c0_i32_1 = arith.constant 0 : i32
    return %arg0, %c0_i32, %c0_i32_0 : i32, i32, i32
  }
  func.func @transform_1(%arg0: i32) -> (i32, i32) {
    %c0_i32 = arith.constant 0 : i32
    %c0_i32_0 = arith.constant 0 : i32
    %c0_i32_1 = arith.constant 0 : i32
    return %c0_i32, %c0_i32_0 : i32, i32
  }
  func.func @transform_2(%arg0: i32) -> (i32, i32) {
    %c0_i32 = arith.constant 0 : i32
    %c0_i32_0 = arith.constant 0 : i32
    %c0_i32_1 = arith.constant 0 : i32
    return %c0_i32, %c0_i32_0 : i32, i32
  }
  func.func @transform_3(%arg0: i32) -> (i32, i32) {
    %c0_i32 = arith.constant 0 : i32
    %c0_i32_0 = arith.constant 0 : i32
    %c0_i32_1 = arith.constant 0 : i32
    return %c0_i32, %c0_i32_0 : i32, i32
  }
  func.func @transform_4(%arg0: i32) -> (i32, i32) {
    %c0_i32 = arith.constant 0 : i32
    %c0_i32_0 = arith.constant 0 : i32
    %c0_i32_1 = arith.constant 0 : i32
    return %c0_i32, %c0_i32_0 : i32, i32
  }
  func.func @transform_5(%arg0: i32) -> (i32, i32) {
    %c0_i32 = arith.constant 0 : i32
    %c0_i32_0 = arith.constant 0 : i32
    %c0_i32_1 = arith.constant 0 : i32
    return %c0_i32, %c0_i32_0 : i32, i32
  }
  func.func @transform_6(%arg0: i32) -> (i32, i32) {
    %c0_i32 = arith.constant 0 : i32
    %c0_i32_0 = arith.constant 0 : i32
    %c0_i32_1 = arith.constant 0 : i32
    return %c0_i32, %c0_i32_0 : i32, i32
  }
  func.func @transform_7(%arg0: i32) -> (i32, i32) {
    %c0_i32 = arith.constant 0 : i32
    %c0_i32_0 = arith.constant 0 : i32
    %c0_i32_1 = arith.constant 0 : i32
    return %c0_i32, %c0_i32_0 : i32, i32
  }
  func.func @transform_8(%arg0: i32) -> (i32, i32) {
    %c0_i32 = arith.constant 0 : i32
    %c0_i32_0 = arith.constant 0 : i32
    %c0_i32_1 = arith.constant 0 : i32
    return %c0_i32, %c0_i32_0 : i32, i32
  }
  func.func @transform_9(%arg0: i32) -> (i32, i32, i32) {
    %c0_i32 = arith.constant 0 : i32
    %c0_i32_0 = arith.constant 0 : i32
    %c0_i32_1 = arith.constant 0 : i32
    return %arg0, %c0_i32, %c0_i32_0 : i32, i32, i32
  }
}

module attributes {stable_mosaic.version = 11 : i64} {
  func.func @_ln_pred_kernel(%arg0: i32, %arg1: memref<1x32x128xbf16, #tpu.memory_space<vmem>>, %arg2: memref<1x128xf32, #tpu.memory_space<vmem>>, %arg3: memref<1x128xf32, #tpu.memory_space<vmem>>, %arg4: memref<128x768xbf16, #tpu.memory_space<vmem>>, %arg5: memref<1x768xf32, #tpu.memory_space<vmem>>, %arg6: memref<1x32x768xf32, #tpu.memory_space<vmem>>) attributes {dimension_semantics = [#tpu.dimension_semantics<parallel>], iteration_bounds = array<i64: 1>, scalar_prefetch = 0 : i64, scratch_operands = 0 : i64, tpu.core_type = #tpu.core_type<tc>, window_params = [{transform_indices = @transform_0, window_bounds = array<i64: 1, 32, 128>}, {pipeline_mode = #tpu.pipeline_mode<synchronous>, transform_indices = @transform_1, window_bounds = array<i64: 1, 128>}, {pipeline_mode = #tpu.pipeline_mode<synchronous>, transform_indices = @transform_2, window_bounds = array<i64: 1, 128>}, {pipeline_mode = #tpu.pipeline_mode<synchronous>, transform_indices = @transform_3, window_bounds = array<i64: 128, 768>}, {pipeline_mode = #tpu.pipeline_mode<synchronous>, transform_indices = @transform_4, window_bounds = array<i64: 1, 768>}, {transform_indices = @transform_5, window_bounds = array<i64: 1, 32, 768>}]} {
    %c0 = arith.constant 0 : index
    %c0_0 = arith.constant 0 : index
    %c0_1 = arith.constant 0 : index
    %0 = vector.load %arg1[%c0, %c0_0, %c0_1] : memref<1x32x128xbf16, #tpu.memory_space<vmem>>, vector<1x32x128xbf16>
    %1 = vector.shape_cast %0 : vector<1x32x128xbf16> to vector<32x128xbf16>
    %2 = arith.extf %1 : vector<32x128xbf16> to vector<32x128xf32>
    %cst = arith.constant dense<0.000000e+00> : vector<32xf32>
    %3 = vector.multi_reduction <add>, %2, %cst [1] : vector<32x128xf32> to vector<32xf32>
    %4 = vector.shape_cast %3 : vector<32xf32> to vector<32x1xf32>
    %cst_2 = arith.constant 1.280000e+02 : f32
    %5 = vector.broadcast %cst_2 : f32 to vector<32x1xf32>
    %6 = arith.divf %4, %5 : vector<32x1xf32>
    %7 = vector.broadcast %6 : vector<32x1xf32> to vector<32x128xf32>
    %8 = arith.subf %2, %7 : vector<32x128xf32>
    %9 = arith.mulf %8, %8 : vector<32x128xf32>
    %cst_3 = arith.constant dense<0.000000e+00> : vector<32xf32>
    %10 = vector.multi_reduction <add>, %9, %cst_3 [1] : vector<32x128xf32> to vector<32xf32>
    %11 = vector.shape_cast %10 : vector<32xf32> to vector<32x1xf32>
    %cst_4 = arith.constant 1.280000e+02 : f32
    %12 = vector.broadcast %cst_4 : f32 to vector<32x1xf32>
    %13 = arith.divf %11, %12 : vector<32x1xf32>
    %14 = vector.broadcast %6 : vector<32x1xf32> to vector<32x128xf32>
    %15 = arith.subf %2, %14 : vector<32x128xf32>
    %cst_5 = arith.constant 9.99999974E-6 : f32
    %16 = vector.broadcast %cst_5 : f32 to vector<32x1xf32>
    %17 = arith.addf %13, %16 : vector<32x1xf32>
    %18 = math.rsqrt %17 : vector<32x1xf32>
    %19 = vector.broadcast %18 : vector<32x1xf32> to vector<32x128xf32>
    %20 = arith.mulf %15, %19 : vector<32x128xf32>
    %c0_6 = arith.constant 0 : index
    %c0_7 = arith.constant 0 : index
    %21 = vector.load %arg2[%c0_6, %c0_7] : memref<1x128xf32, #tpu.memory_space<vmem>>, vector<1x128xf32>
    %22 = vector.broadcast %21 : vector<1x128xf32> to vector<32x128xf32>
    %23 = arith.mulf %20, %22 : vector<32x128xf32>
    %c0_8 = arith.constant 0 : index
    %c0_9 = arith.constant 0 : index
    %24 = vector.load %arg3[%c0_8, %c0_9] : memref<1x128xf32, #tpu.memory_space<vmem>>, vector<1x128xf32>
    %25 = vector.broadcast %24 : vector<1x128xf32> to vector<32x128xf32>
    %26 = arith.addf %23, %25 : vector<32x128xf32>
    %27 = arith.truncf %26 : vector<32x128xf32> to vector<32x128xbf16>
    %c0_10 = arith.constant 0 : index
    %c0_11 = arith.constant 0 : index
    %28 = vector.load %arg4[%c0_10, %c0_11] : memref<128x768xbf16, #tpu.memory_space<vmem>>, vector<128x768xbf16>
    %cst_12 = arith.constant dense<0.000000e+00> : vector<32x768xf32>
    %29 = tpu.matmul %27, %28, %cst_12 {dimension_numbers = #tpu.dot_dimension_numbers<[1], [0], [0], [1], [0, 0, 1, 1], [], []>} : vector<32x128xbf16>, vector<128x768xbf16>, vector<32x768xf32> -> vector<32x768xf32>
    %c0_13 = arith.constant 0 : index
    %c0_14 = arith.constant 0 : index
    %30 = vector.load %arg5[%c0_13, %c0_14] : memref<1x768xf32, #tpu.memory_space<vmem>>, vector<1x768xf32>
    %31 = vector.broadcast %30 : vector<1x768xf32> to vector<32x768xf32>
    %32 = arith.addf %29, %31 : vector<32x768xf32>
    %c0_15 = arith.constant 0 : index
    %c0_16 = arith.constant 0 : index
    %c0_17 = arith.constant 0 : index
    %33 = vector.load %arg6[%c0_15, %c0_16, %c0_17] : memref<1x32x768xf32, #tpu.memory_space<vmem>>, vector<1x32x768xf32>
    %34 = vector.shape_cast %33 : vector<1x32x768xf32> to vector<32x768xf32>
    %35 = vector.shape_cast %32 : vector<32x768xf32> to vector<1x32x768xf32>
    tpu.vector_store %arg6[%c0_15, %c0_16, %c0_17], %35 {strides = array<i32>} : memref<1x32x768xf32, #tpu.memory_space<vmem>>, vector<1x32x768xf32>,
    return
  }
  func.func @transform_0(%arg0: i32) -> (i32, i32, i32) {
    %c0_i32 = arith.constant 0 : i32
    %c0_i32_0 = arith.constant 0 : i32
    %c0_i32_1 = arith.constant 0 : i32
    return %arg0, %c0_i32, %c0_i32_0 : i32, i32, i32
  }
  func.func @transform_1(%arg0: i32) -> (i32, i32) {
    %c0_i32 = arith.constant 0 : i32
    %c0_i32_0 = arith.constant 0 : i32
    %c0_i32_1 = arith.constant 0 : i32
    return %c0_i32, %c0_i32_0 : i32, i32
  }
  func.func @transform_2(%arg0: i32) -> (i32, i32) {
    %c0_i32 = arith.constant 0 : i32
    %c0_i32_0 = arith.constant 0 : i32
    %c0_i32_1 = arith.constant 0 : i32
    return %c0_i32, %c0_i32_0 : i32, i32
  }
  func.func @transform_3(%arg0: i32) -> (i32, i32) {
    %c0_i32 = arith.constant 0 : i32
    %c0_i32_0 = arith.constant 0 : i32
    %c0_i32_1 = arith.constant 0 : i32
    return %c0_i32, %c0_i32_0 : i32, i32
  }
  func.func @transform_4(%arg0: i32) -> (i32, i32) {
    %c0_i32 = arith.constant 0 : i32
    %c0_i32_0 = arith.constant 0 : i32
    %c0_i32_1 = arith.constant 0 : i32
    return %c0_i32, %c0_i32_0 : i32, i32
  }
  func.func @transform_5(%arg0: i32) -> (i32, i32, i32) {
    %c0_i32 = arith.constant 0 : i32
    %c0_i32_0 = arith.constant 0 : i32
    %c0_i32_1 = arith.constant 0 : i32
    return %arg0, %c0_i32, %c0_i32_0 : i32, i32, i32
  }
}

</mosaic_0001>

<llo_original>
// kernel: squeeze.5
$region0: #{squeeze.5}
  %s0 = inlined_call_operand.vmem [shape: f32[196,128], index: 0, kind: input, shape index: {}]
  %s1 = inlined_call_operand.vmem [shape: f32[14,14,128], index: 1, kind: output, shape index: {}]
  %v2 = vld [vmem:[%s0] sm:$0xff]
  %3 = vst [vmem:[%s1] sm:$0xff] %v2
  %s4 = scalar_lea.vmem %s0, 8
  %v5 = vld [vmem:[%s4] sm:$0xff]
  %s6 = scalar_lea.vmem %s1, 8
  %7 = vst [vmem:[%s6] sm:$0x3f] %v5
  %s8 = scalar_lea.vmem %s1, 10
  %9 = vst [vmem:[%s8] sm:$0xc0] %v5
  %s10 = scalar_lea.vmem %s0, 16
  %v11 = vld [vmem:[%s10] sm:$0xff]
  %s12 = scalar_lea.vmem %s1, 18
  %13 = vst [vmem:[%s12] sm:$0xff] %v11
  %s14 = scalar_lea.vmem %s0, 24
  %v15 = vld [vmem:[%s14] sm:$0xff]
  %s16 = scalar_lea.vmem %s1, 26
  %17 = vst [vmem:[%s16] sm:$0xf] %v15
  %s18 = scalar_lea.vmem %s1, 28
  %19 = vst [vmem:[%s18] sm:$0xf0] %v15
  %s20 = scalar_lea.vmem %s0, 32
  %v21 = vld [vmem:[%s20] sm:$0xff]
  %s22 = scalar_lea.vmem %s1, 36
  %23 = vst [vmem:[%s22] sm:$0xff] %v21
  %s24 = scalar_lea.vmem %s0, 40
  %v25 = vld [vmem:[%s24] sm:$0xff]
  %s26 = scalar_lea.vmem %s1, 44
  %27 = vst [vmem:[%s26] sm:$0x3] %v25
  %s28 = scalar_lea.vmem %s1, 46
  %29 = vst [vmem:[%s28] sm:$0xfc] %v25
  %s30 = scalar_lea.vmem %s0, 48
  %v31 = vld [vmem:[%s30] sm:$0xff]
  %s32 = scalar_lea.vmem %s1, 54
  %33 = vst [vmem:[%s32] sm:$0xff] %v31
  %s34 = scalar_lea.vmem %s0, 56
  %v35 = vld [vmem:[%s34] sm:$0xff]
  %s36 = scalar_lea.vmem %s1, 64
  %37 = vst [vmem:[%s36] sm:$0xff] %v35
  %s38 = scalar_lea.vmem %s0, 64
  %v39 = vld [vmem:[%s38] sm:$0xff]
  %s40 = scalar_lea.vmem %s1, 72
  %41 = vst [vmem:[%s40] sm:$0x3f] %v39
  %s42 = scalar_lea.vmem %s1, 74
  %43 = vst [vmem:[%s42] sm:$0xc0] %v39
  %s44 = scalar_lea.vmem %s0, 72
  %v45 = vld [vmem:[%s44] sm:$0xff]
  %s46 = scalar_lea.vmem %s1, 82
  %47 = vst [vmem:[%s46] sm:$0xff] %v45
  %s48 = scalar_lea.vmem %s0, 80
  %v49 = vld [vmem:[%s48] sm:$0xff]
  %s50 = scalar_lea.vmem %s1, 90
  %51 = vst [vmem:[%s50] sm:$0xf] %v49
  %s52 = scalar_lea.vmem %s1, 92
  %53 = vst [vmem:[%s52] sm:$0xf0] %v49
  %s54 = scalar_lea.vmem %s0, 88
  %v55 = vld [vmem:[%s54] sm:$0xff]
  %s56 = scalar_lea.vmem %s1, 100
  %57 = vst [vmem:[%s56] sm:$0xff] %v55
  %s58 = scalar_lea.vmem %s0, 96
  %v59 = vld [vmem:[%s58] sm:$0xff]
  %s60 = scalar_lea.vmem %s1, 108
  %61 = vst [vmem:[%s60] sm:$0x3] %v59
  %s62 = scalar_lea.vmem %s1, 110
  %63 = vst [vmem:[%s62] sm:$0xfc] %v59
  %s64 = scalar_lea.vmem %s0, 104
  %v65 = vld [vmem:[%s64] sm:$0xff]
  %s66 = scalar_lea.vmem %s1, 118
  %67 = vst [vmem:[%s66] sm:$0xff] %v65
  %s68 = scalar_lea.vmem %s0, 112
  %v69 = vld [vmem:[%s68] sm:$0xff]
  %s70 = scalar_lea.vmem %s1, 128
  %71 = vst [vmem:[%s70] sm:$0xff] %v69
  %s72 = scalar_lea.vmem %s0, 120
  %v73 = vld [vmem:[%s72] sm:$0xff]
  %s74 = scalar_lea.vmem %s1, 136
  %75 = vst [vmem:[%s74] sm:$0x3f] %v73
  %s76 = scalar_lea.vmem %s1, 138
  %77 = vst [vmem:[%s76] sm:$0xc0] %v73
  %s78 = scalar_lea.vmem %s0, 128
  %v79 = vld [vmem:[%s78] sm:$0xff]
  %s80 = scalar_lea.vmem %s1, 146
  %81 = vst [vmem:[%s80] sm:$0xff] %v79
  %s82 = scalar_lea.vmem %s0, 136
  %v83 = vld [vmem:[%s82] sm:$0xff]
  %s84 = scalar_lea.vmem %s1, 154
  %85 = vst [vmem:[%s84] sm:$0xf] %v83
  %s86 = scalar_lea.vmem %s1, 156
  %87 = vst [vmem:[%s86] sm:$0xf0] %v83
  %s88 = scalar_lea.vmem %s0, 144
  %v89 = vld [vmem:[%s88] sm:$0xff]
  %s90 = scalar_lea.vmem %s1, 164
  %91 = vst [vmem:[%s90] sm:$0xff] %v89
  %s92 = scalar_lea.vmem %s0, 152
  %v93 = vld [vmem:[%s92] sm:$0xff]
  %s94 = scalar_lea.vmem %s1, 172
  %95 = vst [vmem:[%s94] sm:$0x3] %v93
  %s96 = scalar_lea.vmem %s1, 174
  %97 = vst [vmem:[%s96] sm:$0xfc] %v93
  %s98 = scalar_lea.vmem %s0, 160
  %v99 = vld [vmem:[%s98] sm:$0xff]
  %s100 = scalar_lea.vmem %s1, 182
  %101 = vst [vmem:[%s100] sm:$0xff] %v99
  %s102 = scalar_lea.vmem %s0, 168
  %v103 = vld [vmem:[%s102] sm:$0xff]
  %s104 = scalar_lea.vmem %s1, 192
  %105 = vst [vmem:[%s104] sm:$0xff] %v103
  %s106 = scalar_lea.vmem %s0, 176
  %v107 = vld [vmem:[%s106] sm:$0xff]
  %s108 = scalar_lea.vmem %s1, 200
  %109 = vst [vmem:[%s108] sm:$0x3f] %v107
  %s110 = scalar_lea.vmem %s1, 202
  %111 = vst [vmem:[%s110] sm:$0xc0] %v107
  %s112 = scalar_lea.vmem %s0, 184
  %v113 = vld [vmem:[%s112] sm:$0xff]
  %s114 = scalar_lea.vmem %s1, 210
  %115 = vst [vmem:[%s114] sm:$0xff] %v113
  %s116 = scalar_lea.vmem %s0, 192
  %v117 = vld [vmem:[%s116] sm:$0xf]
  %s118 = scalar_lea.vmem %s1, 218
  %119 = vst [vmem:[%s118] sm:$0xf] %v117

// kernel: mae_forward.3
$region0: #{mae_forward.3}
  #allocation0 [shape = 'u32[]', space=smem, size = 0x4, offset = 0x4, fixed_abs, tag = 'smem constant byte address 0x4 - core index']
  #allocation1 [shape = 'u32[72,128]{1,0:T(1,128)}', space=vmem, size = 0x9000, scoped, tag = 'internal scratch']
  %s0 = inlined_call_operand.vmem [shape: bf16[2,32,128], index: 0, kind: input, shape index: {}]
  %s1 = inlined_call_operand.vmem [shape: f32[1,128], index: 1, kind: input, shape index: {}]
  %s2 = inlined_call_operand.vmem [shape: f32[1,128], index: 2, kind: input, shape index: {}]
  %s3 = inlined_call_operand.vmem [shape: bf16[128,768], index: 3, kind: input, shape index: {}]
  %s4 = inlined_call_operand.vmem [shape: f32[1,768], index: 4, kind: input, shape index: {}]
  %s5 = inlined_call_operand.vmem [shape: f32[1,32,768], index: 5, kind: output, shape index: {}]
  %s6 = sld [smem:[#allocation0]]
  $region30: #{mae_forward.3} parent=0
    _
  %s8 = ssub.s32 1, %s6
  %s9 = scalar_select 0, %s8, %s6
  // Predicated region
  $region2: #{mae_forward.3} parent=0 // pred_check
    _
  $region3: #{mae_forward.3} parent=0 // pred_check_branch
    %11 = sbr.rel (0) target = $region5
  $region4: #{mae_forward.3} parent=0 // pred_region
    _
  $region5: #{mae_forward.3} parent=0 // pred_fallthru
    _
  // Predicated region
  $region6: #{mae_forward.3} parent=0 // pred_check
    _
  $region7: #{mae_forward.3} parent=0 // pred_check_branch
    %13 = sbr.rel (0) target = $region9
  $region8: #{mae_forward.3} parent=0 // pred_region
    _
  $region9: #{mae_forward.3} parent=0 // pred_fallthru
    _
  // Predicated region
  $region10: #{mae_forward.3} parent=0 // pred_check
    _
  $region11: #{mae_forward.3} parent=0 // pred_check_branch
    %15 = sbr.rel (0) target = $region13
  $region12: #{mae_forward.3} parent=0 // pred_region
    _
  $region13: #{mae_forward.3} parent=0 // pred_fallthru
    _
  // Predicated region
  $region14: #{mae_forward.3} parent=0 // pred_check
    _
  $region15: #{mae_forward.3} parent=0 // pred_check_branch
    %17 = sbr.rel (0) target = $region17
  $region16: #{mae_forward.3} parent=0 // pred_region
    _
  $region17: #{mae_forward.3} parent=0 // pred_fallthru
    _
  // Predicated region
  $region18: #{mae_forward.3} parent=0 // pred_check
    _
  $region19: #{mae_forward.3} parent=0 // pred_check_branch
    %19 = sbr.rel (0) target = $region21
  $region20: #{mae_forward.3} parent=0 // pred_region
    _
  $region21: #{mae_forward.3} parent=0 // pred_fallthru
    _
  %v20 = vld [vmem:[%s0] sm:$0xf]
  %v21 = vld [vmem:[%s0 + $0x4] sm:$0xf]
  %v22 = vld [vmem:[%s0 + $0x8] sm:$0xf]
  %v23 = vld [vmem:[%s0 + $0xc] sm:$0xf]
  %v24 = vunpack.c.l.bf16 %v20
  %v25 = vunpack.c.l.bf16 %v21
  %v26 = vunpack.c.l.bf16 %v22
  %v27 = vunpack.c.l.bf16 %v23
  %28 = vadd.xlane.f32.xlu0 %v24
  %v29 = vpop.xlane.xlu0 %28
  %30 = vadd.xlane.f32.xlu0 %v25
  %v31 = vpop.xlane.xlu0 %30
  %32 = vadd.xlane.f32.xlu0 %v26
  %v33 = vpop.xlane.xlu0 %32
  %34 = vadd.xlane.f32.xlu0 %v27
  %v35 = vpop.xlane.xlu0 %34
  %v36 = vrcp.pop 128.0
  %v37 = vmul.f32 128.0, %v36
  %v38 = vsub.f32 1.0, %v37
  %v39 = vmul.f32 %v36, %v38
  %v40 = vadd.f32 %v36, %v39
  %vm41 = vweird.f32 %v36
  %v42 = vsel %vm41, %v36, %v40
  %v43 = vmul.f32 %v29, %v42
  %v44 = vmul.f32 %v31, %v42
  %v45 = vmul.f32 %v33, %v42
  %v46 = vmul.f32 %v35, %v42
  %v47 = vsub.f32 %v24, %v43
  %v48 = vsub.f32 %v25, %v44
  %v49 = vsub.f32 %v26, %v45
  %v50 = vsub.f32 %v27, %v46
  %v51 = vmul.f32 %v47, %v47
  %v52 = vmul.f32 %v48, %v48
  %v53 = vmul.f32 %v49, %v49
  %v54 = vmul.f32 %v50, %v50
  %55 = vadd.xlane.f32.xlu0 %v51
  %v56 = vpop.xlane.xlu0 %55
  %57 = vadd.xlane.f32.xlu0 %v52
  %v58 = vpop.xlane.xlu0 %57
  %59 = vadd.xlane.f32.xlu0 %v53
  %v60 = vpop.xlane.xlu0 %59
  %61 = vadd.xlane.f32.xlu0 %v54
  %v62 = vpop.xlane.xlu0 %61
  %v63 = vmul.f32 %v56, %v42
  %v64 = vmul.f32 %v58, %v42
  %v65 = vmul.f32 %v60, %v42
  %v66 = vmul.f32 %v62, %v42
  %v67 = vadd.f32 %v63, 1e-05
  %v68 = vadd.f32 %v64, 1e-05
  %v69 = vadd.f32 %v65, 1e-05
  %v70 = vadd.f32 %v66, 1e-05
  %v71 = vrsqrt.pop %v67
  %v72 = vmul.f32 %v71, %v67
  %v73 = vmul.f32 %v72, %v71
  %v74 = vmul.f32 0.5, %v73
  %v75 = vsub.f32 1.5, %v74
  %v76 = vmul.f32 %v71, %v75
  %vm77 = vweird.f32 %v67
  %vm78 = vweird.f32 %v71
  %vm79 = vmor %vm77, %vm78
  %v80 = vsel %vm79, %v71, %v76
  %v81 = vrsqrt.pop %v68
  %v82 = vmul.f32 %v81, %v68
  %v83 = vmul.f32 %v82, %v81
  %v84 = vmul.f32 0.5, %v83
  %v85 = vsub.f32 1.5, %v84
  %v86 = vmul.f32 %v81, %v85
  %vm87 = vweird.f32 %v68
  %vm88 = vweird.f32 %v81
  %vm89 = vmor %vm87, %vm88
  %v90 = vsel %vm89, %v81, %v86
  %v91 = vrsqrt.pop %v69
  %v92 = vmul.f32 %v91, %v69
  %v93 = vmul.f32 %v92, %v91
  %v94 = vmul.f32 0.5, %v93
  %v95 = vsub.f32 1.5, %v94
  %v96 = vmul.f32 %v91, %v95
  %vm97 = vweird.f32 %v69
  %vm98 = vweird.f32 %v91
  %vm99 = vmor %vm97, %vm98
  %v100 = vsel %vm99, %v91, %v96
  %v101 = vrsqrt.pop %v70
  %v102 = vmul.f32 %v101, %v70
  %v103 = vmul.f32 %v102, %v101
  %v104 = vmul.f32 0.5, %v103
  %v105 = vsub.f32 1.5, %v104
  %v106 = vmul.f32 %v101, %v105
  %vm107 = vweird.f32 %v70
  %vm108 = vweird.f32 %v101
  %vm109 = vmor %vm107, %vm108
  %v110 = vsel %vm109, %v101, %v106
  %v111 = vmul.f32 %v47, %v80
  %v112 = vmul.f32 %v48, %v90
  %v113 = vmul.f32 %v49, %v100
  %v114 = vmul.f32 %v50, %v110
  %v115 = vld [vmem:[%s1] sm:$0x1]
  %v117 = vperm.slane %v115, 0
  %v119 = vmul.f32 %v111, %v117
  %v120 = vmul.f32 %v112, %v117
  %v121 = vmul.f32 %v113, %v117
  %v122 = vmul.f32 %v114, %v117
  %v123 = vld [vmem:[%s2] sm:$0x1]
  %v125 = vperm.slane %v123, 0
  %v127 = vadd.f32 %v119, %v125
  %v128 = vadd.f32 %v120, %v125
  %v129 = vadd.f32 %v121, %v125
  %v130 = vadd.f32 %v122, %v125
  %v131 = vpack.c.bf16 %v128, %v127
  %v132 = vpack.c.bf16 %v130, %v129
  %v133 = vld [vmem:[%s3] sm:$0xff]
  %v134 = vld [vmem:[%s3 + $0x8] sm:$0xff]
  %v135 = vld [vmem:[%s3 + $0x10] sm:$0xff]
  %v136 = vld [vmem:[%s3 + $0x18] sm:$0xff]
  %v137 = vld [vmem:[%s3 + $0x20] sm:$0xff]
  %v138 = vld [vmem:[%s3 + $0x28] sm:$0xff]
  %v139 = vld [vmem:[%s3 + $0x30] sm:$0xff]
  %v140 = vld [vmem:[%s3 + $0x38] sm:$0xff]
  %v141 = vld [vmem:[%s3 + $0x40] sm:$0xff]
  %v142 = vld [vmem:[%s3 + $0x48] sm:$0xff]
  %v143 = vld [vmem:[%s3 + $0x50] sm:$0xff]
  %v144 = vld [vmem:[%s3 + $0x58] sm:$0xff]
  %v145 = vld [vmem:[%s3 + $0x60] sm:$0xff]
  %v146 = vld [vmem:[%s3 + $0x68] sm:$0xff]
  %v147 = vld [vmem:[%s3 + $0x70] sm:$0xff]
  %v148 = vld [vmem:[%s3 + $0x78] sm:$0xff]
  %v149 = vld [vmem:[%s3 + $0x80] sm:$0xff]
  %v150 = vld [vmem:[%s3 + $0x88] sm:$0xff]
  %v151 = vld [vmem:[%s3 + $0x90] sm:$0xff]
  %v152 = vld [vmem:[%s3 + $0x98] sm:$0xff]
  %v153 = vld [vmem:[%s3 + $0xa0] sm:$0xff]
  %v154 = vld [vmem:[%s3 + $0xa8] sm:$0xff]
  %v155 = vld [vmem:[%s3 + $0xb0] sm:$0xff]
  %v156 = vld [vmem:[%s3 + $0xb8] sm:$0xff]
  %v157 = vld [vmem:[%s3 + $0xc0] sm:$0xff]
  %v158 = vld [vmem:[%s3 + $0xc8] sm:$0xff]
  %v159 = vld [vmem:[%s3 + $0xd0] sm:$0xff]
  %v160 = vld [vmem:[%s3 + $0xd8] sm:$0xff]
  %v161 = vld [vmem:[%s3 + $0xe0] sm:$0xff]
  %v162 = vld [vmem:[%s3 + $0xe8] sm:$0xff]
  %v163 = vld [vmem:[%s3 + $0xf0] sm:$0xff]
  %v164 = vld [vmem:[%s3 + $0xf8] sm:$0xff]
  %v165 = vld [vmem:[%s3 + $0x100] sm:$0xff]
  %v166 = vld [vmem:[%s3 + $0x108] sm:$0xff]
  %v167 = vld [vmem:[%s3 + $0x110] sm:$0xff]
  %v168 = vld [vmem:[%s3 + $0x118] sm:$0xff]
  %v169 = vld [vmem:[%s3 + $0x120] sm:$0xff]
  %v170 = vld [vmem:[%s3 + $0x128] sm:$0xff]
  %v171 = vld [vmem:[%s3 + $0x130] sm:$0xff]
  %v172 = vld [vmem:[%s3 + $0x138] sm:$0xff]
  %v173 = vld [vmem:[%s3 + $0x140] sm:$0xff]
  %v174 = vld [vmem:[%s3 + $0x148] sm:$0xff]
  %v175 = vld [vmem:[%s3 + $0x150] sm:$0xff]
  %v176 = vld [vmem:[%s3 + $0x158] sm:$0xff]
  %v177 = vld [vmem:[%s3 + $0x160] sm:$0xff]
  %v178 = vld [vmem:[%s3 + $0x168] sm:$0xff]
  %v179 = vld [vmem:[%s3 + $0x170] sm:$0xff]
  %v180 = vld [vmem:[%s3 + $0x178] sm:$0xff]
  %v181 = vld [vmem:[%s4] sm:$0x3f]
  %v183 = vperm.slane %v181, 0
  %v184 = vperm.slane %v181, 1
  %v185 = vperm.slane %v181, 2
  %v186 = vperm.slane %v181, 3
  %v187 = vperm.slane %v181, 4
  %v188 = vperm.slane %v181, 5
  %v243 = vunpack.c.l.b16 %v133
  %v244 = vunpack.c.h.b16 %v133
  %v245 = vunpack.c.l.b16 %v134
  %v246 = vunpack.c.h.b16 %v134
  %v247 = vunpack.c.l.b16 %v135
  %v248 = vunpack.c.h.b16 %v135
  %v249 = vunpack.c.l.b16 %v136
  %v250 = vunpack.c.h.b16 %v136
  %v251 = vunpack.c.l.b16 %v137
  %v252 = vunpack.c.h.b16 %v137
  %v253 = vunpack.c.l.b16 %v138
  %v254 = vunpack.c.h.b16 %v138
  %v255 = vunpack.c.l.b16 %v139
  %v256 = vunpack.c.h.b16 %v139
  %v257 = vunpack.c.l.b16 %v140
  %v258 = vunpack.c.h.b16 %v140
  %v259 = vunpack.c.l.b16 %v141
  %v260 = vunpack.c.h.b16 %v141
  %v261 = vunpack.c.l.b16 %v142
  %v262 = vunpack.c.h.b16 %v142
  %v263 = vunpack.c.l.b16 %v143
  %v264 = vunpack.c.h.b16 %v143
  %v265 = vunpack.c.l.b16 %v144
  %v266 = vunpack.c.h.b16 %v144
  %v267 = vunpack.c.l.b16 %v145
  %v268 = vunpack.c.h.b16 %v145
  %v269 = vunpack.c.l.b16 %v146
  %v270 = vunpack.c.h.b16 %v146
  %v271 = vunpack.c.l.b16 %v147
  %v272 = vunpack.c.h.b16 %v147
  %v273 = vunpack.c.l.b16 %v148
  %v274 = vunpack.c.h.b16 %v148
  %v275 = vunpack.c.l.b16 %v149
  %v276 = vunpack.c.h.b16 %v149
  %v277 = vunpack.c.l.b16 %v150
  %v278 = vunpack.c.h.b16 %v150
  %v279 = vunpack.c.l.b16 %v151
  %v280 = vunpack.c.h.b16 %v151
  %v281 = vunpack.c.l.b16 %v152
  %v282 = vunpack.c.h.b16 %v152
  %v283 = vunpack.c.l.b16 %v153
  %v284 = vunpack.c.h.b16 %v153
  %v285 = vunpack.c.l.b16 %v154
  %v286 = vunpack.c.h.b16 %v154
  %v287 = vunpack.c.l.b16 %v155
  %v288 = vunpack.c.h.b16 %v155
  %v289 = vunpack.c.l.b16 %v156
  %v290 = vunpack.c.h.b16 %v156
  %v291 = vunpack.c.l.b16 %v157
  %v292 = vunpack.c.h.b16 %v157
  %v293 = vunpack.c.l.b16 %v158
  %v294 = vunpack.c.h.b16 %v158
  %v295 = vunpack.c.l.b16 %v159
  %v296 = vunpack.c.h.b16 %v159
  %v297 = vunpack.c.l.b16 %v160
  %v298 = vunpack.c.h.b16 %v160
  %v299 = vunpack.c.l.b16 %v161
  %v300 = vunpack.c.h.b16 %v161
  %v301 = vunpack.c.l.b16 %v162
  %v302 = vunpack.c.h.b16 %v162
  %v303 = vunpack.c.l.b16 %v163
  %v304 = vunpack.c.h.b16 %v163
  %v305 = vunpack.c.l.b16 %v164
  %v306 = vunpack.c.h.b16 %v164
  %v307 = vunpack.c.l.b16 %v165
  %v308 = vunpack.c.h.b16 %v165
  %v309 = vunpack.c.l.b16 %v166
  %v310 = vunpack.c.h.b16 %v166
  %v311 = vunpack.c.l.b16 %v167
  %v312 = vunpack.c.h.b16 %v167
  %v313 = vunpack.c.l.b16 %v168
  %v314 = vunpack.c.h.b16 %v168
  %v315 = vunpack.c.l.b16 %v169
  %v316 = vunpack.c.h.b16 %v169
  %v317 = vunpack.c.l.b16 %v170
  %v318 = vunpack.c.h.b16 %v170
  %v319 = vunpack.c.l.b16 %v171
  %v320 = vunpack.c.h.b16 %v171
  %v321 = vunpack.c.l.b16 %v172
  %v322 = vunpack.c.h.b16 %v172
  %v323 = vunpack.c.l.b16 %v173
  %v324 = vunpack.c.h.b16 %v173
  %v325 = vunpack.c.l.b16 %v174
  %v326 = vunpack.c.h.b16 %v174
  %v327 = vunpack.c.l.b16 %v175
  %v328 = vunpack.c.h.b16 %v175
  %v329 = vunpack.c.l.b16 %v176
  %v330 = vunpack.c.h.b16 %v176
  %v331 = vunpack.c.l.b16 %v177
  %v332 = vunpack.c.h.b16 %v177
  %v333 = vunpack.c.l.b16 %v178
  %v334 = vunpack.c.h.b16 %v178
  %v335 = vunpack.c.l.b16 %v179
  %v336 = vunpack.c.h.b16 %v179
  %v337 = vunpack.c.l.b16 %v180
  %v338 = vunpack.c.h.b16 %v180
  %v339 = vpack.c.b16 %v249, %v243
  %v340 = vpack.c.b16 %v250, %v244
  %v341 = vpack.c.b16 %v251, %v245
  %v342 = vpack.c.b16 %v252, %v246
  %v343 = vpack.c.b16 %v253, %v247
  %v344 = vpack.c.b16 %v254, %v248
  %v345 = vpack.c.b16 %v261, %v255
  %v346 = vpack.c.b16 %v262, %v256
  %v347 = vpack.c.b16 %v263, %v257
  %v348 = vpack.c.b16 %v264, %v258
  %v349 = vpack.c.b16 %v265, %v259
  %v350 = vpack.c.b16 %v266, %v260
  %v351 = vpack.c.b16 %v273, %v267
  %v352 = vpack.c.b16 %v274, %v268
  %v353 = vpack.c.b16 %v275, %v269
  %v354 = vpack.c.b16 %v276, %v270
  %v355 = vpack.c.b16 %v277, %v271
  %v356 = vpack.c.b16 %v278, %v272
  %v357 = vpack.c.b16 %v285, %v279
  %v358 = vpack.c.b16 %v286, %v280
  %v359 = vpack.c.b16 %v287, %v281
  %v360 = vpack.c.b16 %v288, %v282
  %v361 = vpack.c.b16 %v289, %v283
  %v362 = vpack.c.b16 %v290, %v284
  %v363 = vpack.c.b16 %v297, %v291
  %v364 = vpack.c.b16 %v298, %v292
  %v365 = vpack.c.b16 %v299, %v293
  %v366 = vpack.c.b16 %v300, %v294
  %v367 = vpack.c.b16 %v301, %v295
  %v368 = vpack.c.b16 %v302, %v296
  %v369 = vpack.c.b16 %v309, %v303
  %v370 = vpack.c.b16 %v310, %v304
  %v371 = vpack.c.b16 %v311, %v305
  %v372 = vpack.c.b16 %v312, %v306
  %v373 = vpack.c.b16 %v313, %v307
  %v374 = vpack.c.b16 %v314, %v308
  %v375 = vpack.c.b16 %v321, %v315
  %v376 = vpack.c.b16 %v322, %v316
  %v377 = vpack.c.b16 %v323, %v317
  %v378 = vpack.c.b16 %v324, %v318
  %v379 = vpack.c.b16 %v325, %v319
  %v380 = vpack.c.b16 %v326, %v320
  %v381 = vpack.c.b16 %v333, %v327
  %v382 = vpack.c.b16 %v334, %v328
  %v383 = vpack.c.b16 %v335, %v329
  %v384 = vpack.c.b16 %v336, %v330
  %v385 = vpack.c.b16 %v337, %v331
  %v386 = vpack.c.b16 %v338, %v332
  %435 = vmatpush.bf16.msra.mxu0 %v381
  %436 = vmatpush.bf16.msra.mxu0 %v375
  %437 = vmatpush.bf16.msra.mxu0 %v369
  %438 = vmatpush.bf16.msra.mxu0 %v363
  %439 = vmatpush.bf16.msra.mxu0 %v357
  %440 = vmatpush.bf16.msra.mxu0 %v351
  %441 = vmatpush.bf16.msra.mxu0 %v345
  %442 = vmatpush.bf16.msra.mxu0 %v339
  %443 = vmatmul.bf16.gmra.mxu0 %v131
  %v444 = vpop.f32.mrf.mxu0
  %v445 = vadd.f32 %v183, %v444
  %v446 = vpop.f32.mrf.mxu0
  %v447 = vadd.f32 %v183, %v446
  %448 = vmatmul.bf16.gmra.mxu0 %v132
  %v449 = vpop.f32.mrf.mxu0
  %v450 = vadd.f32 %v183, %v449
  %v451 = vpop.f32.mrf.mxu0
  %v452 = vadd.f32 %v183, %v451
  %453 = vdwg.mxu0
  %454 = vmatpush.bf16.msra.mxu0 %v382
  %455 = vmatpush.bf16.msra.mxu0 %v376
  %456 = vmatpush.bf16.msra.mxu0 %v370
  %457 = vmatpush.bf16.msra.mxu0 %v364
  %458 = vmatpush.bf16.msra.mxu0 %v358
  %459 = vmatpush.bf16.msra.mxu0 %v352
  %460 = vmatpush.bf16.msra.mxu0 %v346
  %461 = vmatpush.bf16.msra.mxu0 %v340
  %462 = vmatmul.bf16.gmra.mxu0 %v131
  %v463 = vpop.f32.mrf.mxu0
  %v464 = vadd.f32 %v184, %v463
  %v465 = vpop.f32.mrf.mxu0
  %v466 = vadd.f32 %v184, %v465
  %467 = vmatmul.bf16.gmra.mxu0 %v132
  %v468 = vpop.f32.mrf.mxu0
  %v469 = vadd.f32 %v184, %v468
  %v470 = vpop.f32.mrf.mxu0
  %v471 = vadd.f32 %v184, %v470
  %472 = vdwg.mxu0
  %473 = vmatpush.bf16.msra.mxu0 %v383
  %474 = vmatpush.bf16.msra.mxu0 %v377
  %475 = vmatpush.bf16.msra.mxu0 %v371
  %476 = vmatpush.bf16.msra.mxu0 %v365
  %477 = vmatpush.bf16.msra.mxu0 %v359
  %478 = vmatpush.bf16.msra.mxu0 %v353
  %479 = vmatpush.bf16.msra.mxu0 %v347
  %480 = vmatpush.bf16.msra.mxu0 %v341
  %481 = vmatmul.bf16.gmra.mxu0 %v131
  %v482 = vpop.f32.mrf.mxu0
  %v483 = vadd.f32 %v185, %v482
  %v484 = vpop.f32.mrf.mxu0
  %v485 = vadd.f32 %v185, %v484
  %486 = vmatmul.bf16.gmra.mxu0 %v132
  %v487 = vpop.f32.mrf.mxu0
  %v488 = vadd.f32 %v185, %v487
  %v489 = vpop.f32.mrf.mxu0
  %v490 = vadd.f32 %v185, %v489
  %491 = vdwg.mxu0
  %492 = vmatpush.bf16.msra.mxu0 %v384
  %493 = vmatpush.bf16.msra.mxu0 %v378
  %494 = vmatpush.bf16.msra.mxu0 %v372
  %495 = vmatpush.bf16.msra.mxu0 %v366
  %496 = vmatpush.bf16.msra.mxu0 %v360
  %497 = vmatpush.bf16.msra.mxu0 %v354
  %498 = vmatpush.bf16.msra.mxu0 %v348
  %499 = vmatpush.bf16.msra.mxu0 %v342
  %500 = vmatmul.bf16.gmra.mxu0 %v131
  %v501 = vpop.f32.mrf.mxu0
  %v502 = vadd.f32 %v186, %v501
  %v503 = vpop.f32.mrf.mxu0
  %v504 = vadd.f32 %v186, %v503
  %505 = vmatmul.bf16.gmra.mxu0 %v132
  %v506 = vpop.f32.mrf.mxu0
  %v507 = vadd.f32 %v186, %v506
  %v508 = vpop.f32.mrf.mxu0
  %v509 = vadd.f32 %v186, %v508
  %510 = vdwg.mxu0
  %511 = vmatpush.bf16.msra.mxu0 %v385
  %512 = vmatpush.bf16.msra.mxu0 %v379
  %513 = vmatpush.bf16.msra.mxu0 %v373
  %514 = vmatpush.bf16.msra.mxu0 %v367
  %515 = vmatpush.bf16.msra.mxu0 %v361
  %516 = vmatpush.bf16.msra.mxu0 %v355
  %517 = vmatpush.bf16.msra.mxu0 %v349
  %518 = vmatpush.bf16.msra.mxu0 %v343
  %519 = vmatmul.bf16.gmra.mxu0 %v131
  %v520 = vpop.f32.mrf.mxu0
  %v521 = vadd.f32 %v187, %v520
  %v522 = vpop.f32.mrf.mxu0
  %v523 = vadd.f32 %v187, %v522
  %524 = vmatmul.bf16.gmra.mxu0 %v132
  %v525 = vpop.f32.mrf.mxu0
  %v526 = vadd.f32 %v187, %v525
  %v527 = vpop.f32.mrf.mxu0
  %v528 = vadd.f32 %v187, %v527
  %529 = vdwg.mxu0
  %530 = vmatpush.bf16.msra.mxu0 %v386
  %531 = vmatpush.bf16.msra.mxu0 %v380
  %532 = vmatpush.bf16.msra.mxu0 %v374
  %533 = vmatpush.bf16.msra.mxu0 %v368
  %534 = vmatpush.bf16.msra.mxu0 %v362
  %535 = vmatpush.bf16.msra.mxu0 %v356
  %536 = vmatpush.bf16.msra.mxu0 %v350
  %537 = vmatpush.bf16.msra.mxu0 %v344
  %538 = vmatmul.bf16.gmra.mxu0 %v131
  %v539 = vpop.f32.mrf.mxu0
  %v540 = vadd.f32 %v188, %v539
  %v541 = vpop.f32.mrf.mxu0
  %v542 = vadd.f32 %v188, %v541
  %543 = vmatmul.bf16.gmra.mxu0 %v132
  %v544 = vpop.f32.mrf.mxu0
  %v545 = vadd.f32 %v188, %v544
  %v546 = vpop.f32.mrf.mxu0
  %v547 = vadd.f32 %v188, %v546
  %548 = vdwg.mxu0
  %549 = vst [vmem:[%s5] sm:$0xff] %v445
  %550 = vst [vmem:[%s5 + $0x8] sm:$0xff] %v464
  %551 = vst [vmem:[%s5 + $0x10] sm:$0xff] %v483
  %552 = vst [vmem:[%s5 + $0x18] sm:$0xff] %v502
  %553 = vst [vmem:[%s5 + $0x20] sm:$0xff] %v521
  %554 = vst [vmem:[%s5 + $0x28] sm:$0xff] %v540
  %555 = vst [vmem:[%s5 + $0x30] sm:$0xff] %v447
  %556 = vst [vmem:[%s5 + $0x38] sm:$0xff] %v466
  %557 = vst [vmem:[%s5 + $0x40] sm:$0xff] %v485
  %558 = vst [vmem:[%s5 + $0x48] sm:$0xff] %v504
  %559 = vst [vmem:[%s5 + $0x50] sm:$0xff] %v523
  %560 = vst [vmem:[%s5 + $0x58] sm:$0xff] %v542
  %561 = vst [vmem:[%s5 + $0x60] sm:$0xff] %v450
  %562 = vst [vmem:[%s5 + $0x68] sm:$0xff] %v469
  %563 = vst [vmem:[%s5 + $0x70] sm:$0xff] %v488
  %564 = vst [vmem:[%s5 + $0x78] sm:$0xff] %v507
  %565 = vst [vmem:[%s5 + $0x80] sm:$0xff] %v526
  %566 = vst [vmem:[%s5 + $0x88] sm:$0xff] %v545
  %567 = vst [vmem:[%s5 + $0x90] sm:$0xff] %v452
  %568 = vst [vmem:[%s5 + $0x98] sm:$0xff] %v471
  %569 = vst [vmem:[%s5 + $0xa0] sm:$0xff] %v490
  %570 = vst [vmem:[%s5 + $0xa8] sm:$0xff] %v509
  %571 = vst [vmem:[%s5 + $0xb0] sm:$0xff] %v528
  %572 = vst [vmem:[%s5 + $0xb8] sm:$0xff] %v547
  // Predicated region
  $region22: #{mae_forward.3} parent=0 // pred_check
    _
  $region23: #{mae_forward.3} parent=0 // pred_check_branch
    %574 = sbr.rel (0) target = $region25
  $region24: #{mae_forward.3} parent=0 // pred_region
    _
  $region25: #{mae_forward.3} parent=0 // pred_fallthru
    _
  // Predicated region
  $region26: #{mae_forward.3} parent=0 // pred_check
    _
  $region27: #{mae_forward.3} parent=0 // pred_check_branch
    %576 = sbr.rel (0) target = $region29
  $region28: #{mae_forward.3} parent=0 // pred_region
    _
  $region29: #{mae_forward.3} parent=0 // pred_fallthru
    _

// kernel: mae_forward.2
$region0: #{mae_forward.2}
  #allocation0 [shape = 'u32[]', space=smem, size = 0x4, offset = 0x4, fixed_abs, tag = 'smem constant byte address 0x4 - core index']
  #allocation1 [shape = 'u32[72,128]{1,0:T(1,128)}', space=vmem, size = 0x9000, scoped, tag = 'internal scratch']
  %s0 = inlined_call_operand.vmem [shape: bf16[2,32,768], index: 0, kind: input, shape index: {}]
  %s1 = inlined_call_operand.vmem [shape: bf16[768,128], index: 1, kind: input, shape index: {}]
  %s2 = inlined_call_operand.vmem [shape: f32[1,128], index: 2, kind: input, shape index: {}]
  %s3 = inlined_call_operand.vmem [shape: f32[32,128], index: 3, kind: input, shape index: {}]
  %s4 = inlined_call_operand.vmem [shape: f32[1,128], index: 4, kind: input, shape index: {}]
  %s5 = inlined_call_operand.vmem [shape: f32[1,128], index: 5, kind: input, shape index: {}]
  %s6 = inlined_call_operand.vmem [shape: bf16[128,128], index: 6, kind: input, shape index: {}]
  %s7 = inlined_call_operand.vmem [shape: f32[1,128], index: 7, kind: input, shape index: {}]
  %s8 = inlined_call_operand.vmem [shape: f32[32,128], index: 8, kind: input, shape index: {}]
  %s9 = inlined_call_operand.vmem [shape: bf16[2,32,128], index: 9, kind: output, shape index: {}]
  %s10 = sld [smem:[#allocation0]]
  $region69: #{mae_forward.2} parent=0
    _
  %s12 = ssub.s32 1, %s10
  %s13 = scalar_select 0, %s12, %s10
  loop: start=0, step=1, limit=4
  $region2: #{mae_forward.2} parent=0 // loop_pre_header
    _
  $region3: #{mae_forward.2} parent=0 // loop_header
    %s15 = sphi 0, %s19
    %p16 = scmp.ge.s32.totalorder %s15, 4
    %s25 = sphi 0, %s27
    %s28 = sphi 0, %s25
    %s29 = sphi 0, %s28
    %s45 = sphi 0, %s29
    %s49 = sphi 0, %s49
    %s51 = sphi 0, %s49
    %s52 = sphi 0, %s51
    %s66 = sphi 0, %s52
    %s70 = sphi 0, %s70
    %s72 = sphi 0, %s70
    %s73 = sphi 0, %s72
    %s87 = sphi 0, %s73
    %s91 = sphi 0, %s91
    %s93 = sphi 0, %s91
    %s94 = sphi 0, %s93
    %s108 = sphi 0, %s94
    %s112 = sphi 0, %s112
    %s114 = sphi 0, %s112
    %s115 = sphi 0, %s114
    %s129 = sphi 0, %s115
    %s133 = sphi 0, %s133
    %s135 = sphi 0, %s133
    %s136 = sphi 0, %s135
    %s150 = sphi 0, %s136
    %s154 = sphi 0, %s154
    %s156 = sphi 0, %s154
    %s157 = sphi 0, %s156
    %s171 = sphi 0, %s157
    %s175 = sphi 0, %s175
    %s177 = sphi 0, %s175
    %s178 = sphi 0, %s177
    %s192 = sphi 0, %s178
    %s196 = sphi 0, %s196
    %s198 = sphi 0, %s196
    %s199 = sphi 0, %s198
    %s213 = sphi 0, %s199
    %s219 = sphi 0, %s221
    %s222 = sphi 0, %s219
    %s223 = sphi 0, %s222
    %s239 = sphi 0, %s223
  $region4: #{mae_forward.2} parent=0 // loop_header_branch
    %18 = sbr.rel (%p16) target = $region8
  $region5: #{mae_forward.2} parent=0 // loop_body
    %s20 = ssub.s32 %s15, 1
    %s21 = ssub.s32 %s15, 2
    %s22 = sadd.s32 %s15, 1
    %s23 = ssub.s32 %s15, %s22
    %p24 = scmp.eq.s32.totalorder %s23, 0
    %s26 = sadd.s32 %s25, 1
    %s27 = scalar_select %p24, %s25, %s26
    %p30 = pneg %p24
    %p31 = scmp.eq.s32.totalorder %s15, 1
    %p32 = por %p30, %p31
    %p33 = scmp.ne.s32.totalorder %s25, %s28
    %p34 = scmp.eq.s32.totalorder %s15, 0
    %p35 = por %p33, %p34
    %p36 = scmp.ne.s32.totalorder %s25, %s28
    %p37 = scmp.eq.s32.totalorder %s20, 1
    %p38 = por %p36, %p37
    %p39 = scmp.ne.s32.totalorder %s28, %s29
    %p40 = scmp.eq.s32.totalorder %s20, 0
    %p41 = por %p39, %p40
    %p42 = scmp.ne.s32.totalorder %s28, %s29
    %p43 = scmp.eq.s32.totalorder %s21, 1
    %p44 = por %p42, %p43
    %p46 = scmp.ne.s32.totalorder %s29, %s45
    %p47 = scmp.eq.s32.totalorder %s21, 0
    %p48 = por %p46, %p47
    %s50 = sadd.s32 %s49, 1
    %p53 = scmp.eq.s32.totalorder %s15, 1
    %p54 = scmp.ne.s32.totalorder %s49, %s51
    %p55 = scmp.eq.s32.totalorder %s15, 0
    %p56 = por %p54, %p55
    %p57 = scmp.ne.s32.totalorder %s49, %s51
    %p58 = scmp.eq.s32.totalorder %s20, 1
    %p59 = por %p57, %p58
    %p60 = scmp.ne.s32.totalorder %s51, %s52
    %p61 = scmp.eq.s32.totalorder %s20, 0
    %p62 = por %p60, %p61
    %p63 = scmp.ne.s32.totalorder %s51, %s52
    %p64 = scmp.eq.s32.totalorder %s21, 1
    %p65 = por %p63, %p64
    %p67 = scmp.ne.s32.totalorder %s52, %s66
    %p68 = scmp.eq.s32.totalorder %s21, 0
    %p69 = por %p67, %p68
    %s71 = sadd.s32 %s70, 1
    %p74 = scmp.eq.s32.totalorder %s15, 1
    %p75 = scmp.ne.s32.totalorder %s70, %s72
    %p76 = scmp.eq.s32.totalorder %s15, 0
    %p77 = por %p75, %p76
    %p78 = scmp.ne.s32.totalorder %s70, %s72
    %p79 = scmp.eq.s32.totalorder %s20, 1
    %p80 = por %p78, %p79
    %p81 = scmp.ne.s32.totalorder %s72, %s73
    %p82 = scmp.eq.s32.totalorder %s20, 0
    %p83 = por %p81, %p82
    %p84 = scmp.ne.s32.totalorder %s72, %s73
    %p85 = scmp.eq.s32.totalorder %s21, 1
    %p86 = por %p84, %p85
    %p88 = scmp.ne.s32.totalorder %s73, %s87
    %p89 = scmp.eq.s32.totalorder %s21, 0
    %p90 = por %p88, %p89
    %s92 = sadd.s32 %s91, 1
    %p95 = scmp.eq.s32.totalorder %s15, 1
    %p96 = scmp.ne.s32.totalorder %s91, %s93
    %p97 = scmp.eq.s32.totalorder %s15, 0
    %p98 = por %p96, %p97
    %p99 = scmp.ne.s32.totalorder %s91, %s93
    %p100 = scmp.eq.s32.totalorder %s20, 1
    %p101 = por %p99, %p100
    %p102 = scmp.ne.s32.totalorder %s93, %s94
    %p103 = scmp.eq.s32.totalorder %s20, 0
    %p104 = por %p102, %p103
    %p105 = scmp.ne.s32.totalorder %s93, %s94
    %p106 = scmp.eq.s32.totalorder %s21, 1
    %p107 = por %p105, %p106
    %p109 = scmp.ne.s32.totalorder %s94, %s108
    %p110 = scmp.eq.s32.totalorder %s21, 0
    %p111 = por %p109, %p110
    %s113 = sadd.s32 %s112, 1
    %p116 = scmp.eq.s32.totalorder %s15, 1
    %p117 = scmp.ne.s32.totalorder %s112, %s114
    %p118 = scmp.eq.s32.totalorder %s15, 0
    %p119 = por %p117, %p118
    %p120 = scmp.ne.s32.totalorder %s112, %s114
    %p121 = scmp.eq.s32.totalorder %s20, 1
    %p122 = por %p120, %p121
    %p123 = scmp.ne.s32.totalorder %s114, %s115
    %p124 = scmp.eq.s32.totalorder %s20, 0
    %p125 = por %p123, %p124
    %p126 = scmp.ne.s32.totalorder %s114, %s115
    %p127 = scmp.eq.s32.totalorder %s21, 1
    %p128 = por %p126, %p127
    %p130 = scmp.ne.s32.totalorder %s115, %s129
    %p131 = scmp.eq.s32.totalorder %s21, 0
    %p132 = por %p130, %p131
    %s134 = sadd.s32 %s133, 1
    %p137 = scmp.eq.s32.totalorder %s15, 1
    %p138 = scmp.ne.s32.totalorder %s133, %s135
    %p139 = scmp.eq.s32.totalorder %s15, 0
    %p140 = por %p138, %p139
    %p141 = scmp.ne.s32.totalorder %s133, %s135
    %p142 = scmp.eq.s32.totalorder %s20, 1
    %p143 = por %p141, %p142
    %p144 = scmp.ne.s32.totalorder %s135, %s136
    %p145 = scmp.eq.s32.totalorder %s20, 0
    %p146 = por %p144, %p145
    %p147 = scmp.ne.s32.totalorder %s135, %s136
    %p148 = scmp.eq.s32.totalorder %s21, 1
    %p149 = por %p147, %p148
    %p151 = scmp.ne.s32.totalorder %s136, %s150
    %p152 = scmp.eq.s32.totalorder %s21, 0
    %p153 = por %p151, %p152
    %s155 = sadd.s32 %s154, 1
    %p158 = scmp.eq.s32.totalorder %s15, 1
    %p159 = scmp.ne.s32.totalorder %s154, %s156
    %p160 = scmp.eq.s32.totalorder %s15, 0
    %p161 = por %p159, %p160
    %p162 = scmp.ne.s32.totalorder %s154, %s156
    %p163 = scmp.eq.s32.totalorder %s20, 1
    %p164 = por %p162, %p163
    %p165 = scmp.ne.s32.totalorder %s156, %s157
    %p166 = scmp.eq.s32.totalorder %s20, 0
    %p167 = por %p165, %p166
    %p168 = scmp.ne.s32.totalorder %s156, %s157
    %p169 = scmp.eq.s32.totalorder %s21, 1
    %p170 = por %p168, %p169
    %p172 = scmp.ne.s32.totalorder %s157, %s171
    %p173 = scmp.eq.s32.totalorder %s21, 0
    %p174 = por %p172, %p173
    %s176 = sadd.s32 %s175, 1
    %p179 = scmp.eq.s32.totalorder %s15, 1
    %p180 = scmp.ne.s32.totalorder %s175, %s177
    %p181 = scmp.eq.s32.totalorder %s15, 0
    %p182 = por %p180, %p181
    %p183 = scmp.ne.s32.totalorder %s175, %s177
    %p184 = scmp.eq.s32.totalorder %s20, 1
    %p185 = por %p183, %p184
    %p186 = scmp.ne.s32.totalorder %s177, %s178
    %p187 = scmp.eq.s32.totalorder %s20, 0
    %p188 = por %p186, %p187
    %p189 = scmp.ne.s32.totalorder %s177, %s178
    %p190 = scmp.eq.s32.totalorder %s21, 1
    %p191 = por %p189, %p190
    %p193 = scmp.ne.s32.totalorder %s178, %s192
    %p194 = scmp.eq.s32.totalorder %s21, 0
    %p195 = por %p193, %p194
    %s197 = sadd.s32 %s196, 1
    %p200 = scmp.eq.s32.totalorder %s15, 1
    %p201 = scmp.ne.s32.totalorder %s196, %s198
    %p202 = scmp.eq.s32.totalorder %s15, 0
    %p203 = por %p201, %p202
    %p204 = scmp.ne.s32.totalorder %s196, %s198
    %p205 = scmp.eq.s32.totalorder %s20, 1
    %p206 = por %p204, %p205
    %p207 = scmp.ne.s32.totalorder %s198, %s199
    %p208 = scmp.eq.s32.totalorder %s20, 0
    %p209 = por %p207, %p208
    %p210 = scmp.ne.s32.totalorder %s198, %s199
    %p211 = scmp.eq.s32.totalorder %s21, 1
    %p212 = por %p210, %p211
    %p214 = scmp.ne.s32.totalorder %s199, %s213
    %p215 = scmp.eq.s32.totalorder %s21, 0
    %p216 = por %p214, %p215
    %s217 = ssub.s32 %s15, %s22
    %p218 = scmp.eq.s32.totalorder %s217, 0
    %s220 = sadd.s32 %s219, 1
    %s221 = scalar_select %p218, %s219, %s220
    %p224 = pneg %p218
    %p225 = scmp.eq.s32.totalorder %s15, 1
    %p226 = por %p224, %p225
    %p227 = scmp.ne.s32.totalorder %s219, %s222
    %p228 = scmp.eq.s32.totalorder %s15, 0
    %p229 = por %p227, %p228
    %p230 = scmp.ne.s32.totalorder %s219, %s222
    %p231 = scmp.eq.s32.totalorder %s20, 1
    %p232 = por %p230, %p231
    %p233 = scmp.ne.s32.totalorder %s222, %s223
    %p234 = scmp.eq.s32.totalorder %s20, 0
    %p235 = por %p233, %p234
    %p236 = scmp.ne.s32.totalorder %s222, %s223
    %p237 = scmp.eq.s32.totalorder %s21, 1
    %p238 = por %p236, %p237
    %p240 = scmp.ne.s32.totalorder %s223, %s239
    %p241 = scmp.eq.s32.totalorder %s21, 0
    %p242 = por %p240, %p241
    %p243 = scmp.le.s32.totalorder 1, %s15
    %p244 = scmp.lt.s32.totalorder %s15, 3
    %p245 = pnand %p243, %p244
    %p246 = pneg %p245
    // Predicated region
    $region9: #{mae_forward.2} parent=5 // pred_check
      _
    $region10: #{mae_forward.2} parent=5 // pred_check_branch
      %248 = sbr.rel (%p245) target = $region12
    $region11: #{mae_forward.2} parent=5 // pred_region
      %s249 = ssub.s32 %s15, 1
      // Predicated region
      $region13: #{mae_forward.2} parent=11 // pred_check
        %p250 = pneg %p62
      $region14: #{mae_forward.2} parent=11 // pred_check_branch
        %252 = sbr.rel (%p250) target = $region16
      $region15: #{mae_forward.2} parent=11 // pred_region
        _
      $region16: #{mae_forward.2} parent=11 // pred_fallthru
        _
      // Predicated region
      $region17: #{mae_forward.2} parent=11 // pred_check
        %p253 = pneg %p83
      $region18: #{mae_forward.2} parent=11 // pred_check_branch
        %255 = sbr.rel (%p253) target = $region20
      $region19: #{mae_forward.2} parent=11 // pred_region
        _
      $region20: #{mae_forward.2} parent=11 // pred_fallthru
        _
      // Predicated region
      $region21: #{mae_forward.2} parent=11 // pred_check
        %p256 = pneg %p104
      $region22: #{mae_forward.2} parent=11 // pred_check_branch
        %258 = sbr.rel (%p256) target = $region24
      $region23: #{mae_forward.2} parent=11 // pred_region
        _
      $region24: #{mae_forward.2} parent=11 // pred_fallthru
        _
      // Predicated region
      $region25: #{mae_forward.2} parent=11 // pred_check
        %p259 = pneg %p125
      $region26: #{mae_forward.2} parent=11 // pred_check_branch
        %261 = sbr.rel (%p259) target = $region28
      $region27: #{mae_forward.2} parent=11 // pred_region
        _
      $region28: #{mae_forward.2} parent=11 // pred_fallthru
        _
      // Predicated region
      $region29: #{mae_forward.2} parent=11 // pred_check
        %p262 = pneg %p146
      $region30: #{mae_forward.2} parent=11 // pred_check_branch
        %264 = sbr.rel (%p262) target = $region32
      $region31: #{mae_forward.2} parent=11 // pred_region
        _
      $region32: #{mae_forward.2} parent=11 // pred_fallthru
        _
      // Predicated region
      $region33: #{mae_forward.2} parent=11 // pred_check
        %p265 = pneg %p167
      $region34: #{mae_forward.2} parent=11 // pred_check_branch
        %267 = sbr.rel (%p265) target = $region36
      $region35: #{mae_forward.2} parent=11 // pred_region
        _
      $region36: #{mae_forward.2} parent=11 // pred_fallthru
        _
      // Predicated region
      $region37: #{mae_forward.2} parent=11 // pred_check
        %p268 = pneg %p188
      $region38: #{mae_forward.2} parent=11 // pred_check_branch
        %270 = sbr.rel (%p268) target = $region40
      $region39: #{mae_forward.2} parent=11 // pred_region
        _
      $region40: #{mae_forward.2} parent=11 // pred_fallthru
        _
      // Predicated region
      $region41: #{mae_forward.2} parent=11 // pred_check
        %p271 = pneg %p209
      $region42: #{mae_forward.2} parent=11 // pred_check_branch
        %273 = sbr.rel (%p271) target = $region44
      $region43: #{mae_forward.2} parent=11 // pred_region
        _
      $region44: #{mae_forward.2} parent=11 // pred_fallthru
        _
    $region12: #{mae_forward.2} parent=5 // pred_fallthru
      _
    %p274 = scmp.lt.s32.totalorder %s15, 2
    // Predicated region
    $region45: #{mae_forward.2} parent=5 // pred_check
      %p275 = pneg %p274
    $region46: #{mae_forward.2} parent=5 // pred_check_branch
      %277 = sbr.rel (%p275) target = $region48
    $region47: #{mae_forward.2} parent=5 // pred_region
      // Predicated region
      $region49: #{mae_forward.2} parent=47 // pred_check
        %p278 = pneg %p35
      $region50: #{mae_forward.2} parent=47 // pred_check_branch
        %280 = sbr.rel (%p278) target = $region52
      $region51: #{mae_forward.2} parent=47 // pred_region
        %p281 = scmp.lt.s32.totalorder %s15, 1
        %s282 = scalar_select %p281, %s15, 1
        %s283 = smul.addr %s282, 24
        %s284 = smul.addr %s283, 4
        %s285 = scalar_lea.vmem %s0, %s284
      $region52: #{mae_forward.2} parent=47 // pred_fallthru
        _
    $region48: #{mae_forward.2} parent=5 // pred_fallthru
      _
    %p286 = scmp.le.s32.totalorder 1, %s15
    %p287 = scmp.lt.s32.totalorder %s15, 3
    %p288 = pnand %p286, %p287
    %p289 = pneg %p288
    // Predicated region
    $region53: #{mae_forward.2} parent=5 // pred_check
      _
    $region54: #{mae_forward.2} parent=5 // pred_check_branch
      %291 = sbr.rel (%p288) target = $region56
    $region55: #{mae_forward.2} parent=5 // pred_region
      %s292 = ssub.s32 %s15, 1
      %p293 = scmp.lt.s32.totalorder %s20, 1
      %s294 = scalar_select %p293, %s20, 1
      %s295 = smul.addr %s294, 24
      %s296 = smul.addr %s295, 4
      %s297 = scalar_lea.vmem %s0, %s296
      %p298 = pneg %p41
      %p299 = pneg %p38
      %p300 = pneg %p62
      %p301 = pneg %p59
      %p302 = pneg %p83
      %p303 = pneg %p80
      %p304 = pneg %p104
      %p305 = pneg %p101
      %p306 = pneg %p125
      %p307 = pneg %p122
      %p308 = pneg %p146
      %p309 = pneg %p143
      %p310 = pneg %p167
      %p311 = pneg %p164
      %p312 = pneg %p188
      %p313 = pneg %p185
      %p314 = pneg %p209
      %p315 = pneg %p206
      %p316 = pneg %p235
      %p317 = pneg %p232
      %p318 = scmp.lt.s32.totalorder %s20, 1
      %s319 = scalar_select %p318, %s20, 1
      %s320 = smul.addr %s319, 4
      %s321 = smul.addr %s320, 4
      %s322 = scalar_lea.vmem %s9, %s321
      %p323 = scmp.lt.s32.totalorder %s20, 1
      %s324 = scalar_select %p323, %s20, 1
      %s325 = smul.addr %s324, 24
      %s326 = smul.addr %s325, 4
      %s327 = scalar_lea.vmem %s0, %s326
      %p328 = scmp.lt.s32.totalorder %s20, 1
      %s329 = scalar_select %p328, %s20, 1
      %s330 = smul.addr %s329, 4
      %s331 = smul.addr %s330, 4
      %s332 = scalar_lea.vmem %s9, %s331
      %v333 = vld [vmem:[%s327] sm:$0xff]
      %v334 = vld [vmem:[%s327 + $0x8] sm:$0xff]
      %v335 = vld [vmem:[%s327 + $0x10] sm:$0xff]
      %v336 = vld [vmem:[%s327 + $0x18] sm:$0xff]
      %v337 = vld [vmem:[%s327 + $0x20] sm:$0xff]
      %v338 = vld [vmem:[%s327 + $0x28] sm:$0xff]
      %v339 = vld [vmem:[%s327 + $0x30] sm:$0xff]
      %v340 = vld [vmem:[%s327 + $0x38] sm:$0xff]
      %v341 = vld [vmem:[%s327 + $0x40] sm:$0xff]
      %v342 = vld [vmem:[%s327 + $0x48] sm:$0xff]
      %v343 = vld [vmem:[%s327 + $0x50] sm:$0xff]
      %v344 = vld [vmem:[%s327 + $0x58] sm:$0xff]
      %v345 = vld [vmem:[%s1] sm:$0xf]
      %v346 = vld [vmem:[%s1 + $0x4] sm:$0xf]
      %v347 = vld [vmem:[%s1 + $0x8] sm:$0xf]
      %v348 = vld [vmem:[%s1 + $0xc] sm:$0xf]
      %v349 = vld [vmem:[%s1 + $0x10] sm:$0xf]
      %v350 = vld [vmem:[%s1 + $0x14] sm:$0xf]
      %v351 = vld [vmem:[%s1 + $0x18] sm:$0xf]
      %v352 = vld [vmem:[%s1 + $0x1c] sm:$0xf]
      %v353 = vld [vmem:[%s1 + $0x20] sm:$0xf]
      %v354 = vld [vmem:[%s1 + $0x24] sm:$0xf]
      %v355 = vld [vmem:[%s1 + $0x28] sm:$0xf]
      %v356 = vld [vmem:[%s1 + $0x2c] sm:$0xf]
      %v357 = vld [vmem:[%s1 + $0x30] sm:$0xf]
      %v358 = vld [vmem:[%s1 + $0x34] sm:$0xf]
      %v359 = vld [vmem:[%s1 + $0x38] sm:$0xf]
      %v360 = vld [vmem:[%s1 + $0x3c] sm:$0xf]
      %v361 = vld [vmem:[%s1 + $0x40] sm:$0xf]
      %v362 = vld [vmem:[%s1 + $0x44] sm:$0xf]
      %v363 = vld [vmem:[%s1 + $0x48] sm:$0xf]
      %v364 = vld [vmem:[%s1 + $0x4c] sm:$0xf]
      %v365 = vld [vmem:[%s1 + $0x50] sm:$0xf]
      %v366 = vld [vmem:[%s1 + $0x54] sm:$0xf]
      %v367 = vld [vmem:[%s1 + $0x58] sm:$0xf]
      %v368 = vld [vmem:[%s1 + $0x5c] sm:$0xf]
      %v369 = vld [vmem:[%s1 + $0x60] sm:$0xf]
      %v370 = vld [vmem:[%s1 + $0x64] sm:$0xf]
      %v371 = vld [vmem:[%s1 + $0x68] sm:$0xf]
      %v372 = vld [vmem:[%s1 + $0x6c] sm:$0xf]
      %v373 = vld [vmem:[%s1 + $0x70] sm:$0xf]
      %v374 = vld [vmem:[%s1 + $0x74] sm:$0xf]
      %v375 = vld [vmem:[%s1 + $0x78] sm:$0xf]
      %v376 = vld [vmem:[%s1 + $0x7c] sm:$0xf]
      %v377 = vld [vmem:[%s1 + $0x80] sm:$0xf]
      %v378 = vld [vmem:[%s1 + $0x84] sm:$0xf]
      %v379 = vld [vmem:[%s1 + $0x88] sm:$0xf]
      %v380 = vld [vmem:[%s1 + $0x8c] sm:$0xf]
      %v381 = vld [vmem:[%s1 + $0x90] sm:$0xf]
      %v382 = vld [vmem:[%s1 + $0x94] sm:$0xf]
      %v383 = vld [vmem:[%s1 + $0x98] sm:$0xf]
      %v384 = vld [vmem:[%s1 + $0x9c] sm:$0xf]
      %v385 = vld [vmem:[%s1 + $0xa0] sm:$0xf]
      %v386 = vld [vmem:[%s1 + $0xa4] sm:$0xf]
      %v387 = vld [vmem:[%s1 + $0xa8] sm:$0xf]
      %v388 = vld [vmem:[%s1 + $0xac] sm:$0xf]
      %v389 = vld [vmem:[%s1 + $0xb0] sm:$0xf]
      %v390 = vld [vmem:[%s1 + $0xb4] sm:$0xf]
      %v391 = vld [vmem:[%s1 + $0xb8] sm:$0xf]
      %v392 = vld [vmem:[%s1 + $0xbc] sm:$0xf]
      %v393 = vld [vmem:[%s1 + $0xc0] sm:$0xf]
      %v394 = vld [vmem:[%s1 + $0xc4] sm:$0xf]
      %v395 = vld [vmem:[%s1 + $0xc8] sm:$0xf]
      %v396 = vld [vmem:[%s1 + $0xcc] sm:$0xf]
      %v397 = vld [vmem:[%s1 + $0xd0] sm:$0xf]
      %v398 = vld [vmem:[%s1 + $0xd4] sm:$0xf]
      %v399 = vld [vmem:[%s1 + $0xd8] sm:$0xf]
      %v400 = vld [vmem:[%s1 + $0xdc] sm:$0xf]
      %v401 = vld [vmem:[%s1 + $0xe0] sm:$0xf]
      %v402 = vld [vmem:[%s1 + $0xe4] sm:$0xf]
      %v403 = vld [vmem:[%s1 + $0xe8] sm:$0xf]
      %v404 = vld [vmem:[%s1 + $0xec] sm:$0xf]
      %v405 = vld [vmem:[%s1 + $0xf0] sm:$0xf]
      %v406 = vld [vmem:[%s1 + $0xf4] sm:$0xf]
      %v407 = vld [vmem:[%s1 + $0xf8] sm:$0xf]
      %v408 = vld [vmem:[%s1 + $0xfc] sm:$0xf]
      %v409 = vld [vmem:[%s1 + $0x100] sm:$0xf]
      %v410 = vld [vmem:[%s1 + $0x104] sm:$0xf]
      %v411 = vld [vmem:[%s1 + $0x108] sm:$0xf]
      %v412 = vld [vmem:[%s1 + $0x10c] sm:$0xf]
      %v413 = vld [vmem:[%s1 + $0x110] sm:$0xf]
      %v414 = vld [vmem:[%s1 + $0x114] sm:$0xf]
      %v415 = vld [vmem:[%s1 + $0x118] sm:$0xf]
      %v416 = vld [vmem:[%s1 + $0x11c] sm:$0xf]
      %v417 = vld [vmem:[%s1 + $0x120] sm:$0xf]
      %v418 = vld [vmem:[%s1 + $0x124] sm:$0xf]
      %v419 = vld [vmem:[%s1 + $0x128] sm:$0xf]
      %v420 = vld [vmem:[%s1 + $0x12c] sm:$0xf]
      %v421 = vld [vmem:[%s1 + $0x130] sm:$0xf]
      %v422 = vld [vmem:[%s1 + $0x134] sm:$0xf]
      %v423 = vld [vmem:[%s1 + $0x138] sm:$0xf]
      %v424 = vld [vmem:[%s1 + $0x13c] sm:$0xf]
      %v425 = vld [vmem:[%s1 + $0x140] sm:$0xf]
      %v426 = vld [vmem:[%s1 + $0x144] sm:$0xf]
      %v427 = vld [vmem:[%s1 + $0x148] sm:$0xf]
      %v428 = vld [vmem:[%s1 + $0x14c] sm:$0xf]
      %v429 = vld [vmem:[%s1 + $0x150] sm:$0xf]
      %v430 = vld [vmem:[%s1 + $0x154] sm:$0xf]
      %v431 = vld [vmem:[%s1 + $0x158] sm:$0xf]
      %v432 = vld [vmem:[%s1 + $0x15c] sm:$0xf]
      %v433 = vld [vmem:[%s1 + $0x160] sm:$0xf]
      %v434 = vld [vmem:[%s1 + $0x164] sm:$0xf]
      %v435 = vld [vmem:[%s1 + $0x168] sm:$0xf]
      %v436 = vld [vmem:[%s1 + $0x16c] sm:$0xf]
      %v437 = vld [vmem:[%s1 + $0x170] sm:$0xf]
      %v438 = vld [vmem:[%s1 + $0x174] sm:$0xf]
      %v439 = vld [vmem:[%s1 + $0x178] sm:$0xf]
      %v440 = vld [vmem:[%s1 + $0x17c] sm:$0xf]
      %v441 = vld [vmem:[%s2] sm:$0x1]
      %v443 = vperm.slane %v441, 0
      %v457 = vunpack.c.l.b16 %v333
      %v458 = vunpack.c.h.b16 %v333
      %v459 = vunpack.c.l.b16 %v334
      %v460 = vunpack.c.h.b16 %v334
      %v461 = vunpack.c.l.b16 %v335
      %v462 = vunpack.c.h.b16 %v335
      %v463 = vunpack.c.l.b16 %v336
      %v464 = vunpack.c.h.b16 %v336
      %v465 = vunpack.c.l.b16 %v337
      %v466 = vunpack.c.h.b16 %v337
      %v467 = vunpack.c.l.b16 %v338
      %v468 = vunpack.c.h.b16 %v338
      %v469 = vunpack.c.l.b16 %v339
      %v470 = vunpack.c.h.b16 %v339
      %v471 = vunpack.c.l.b16 %v340
      %v472 = vunpack.c.h.b16 %v340
      %v473 = vunpack.c.l.b16 %v341
      %v474 = vunpack.c.h.b16 %v341
      %v475 = vunpack.c.l.b16 %v342
      %v476 = vunpack.c.h.b16 %v342
      %v477 = vunpack.c.l.b16 %v343
      %v478 = vunpack.c.h.b16 %v343
      %v479 = vunpack.c.l.b16 %v344
      %v480 = vunpack.c.h.b16 %v344
      %v481 = vpack.c.b16 %v463, %v457
      %v482 = vpack.c.b16 %v464, %v458
      %v483 = vpack.c.b16 %v465, %v459
      %v484 = vpack.c.b16 %v466, %v460
      %v485 = vpack.c.b16 %v467, %v461
      %v486 = vpack.c.b16 %v468, %v462
      %v487 = vpack.c.b16 %v475, %v469
      %v488 = vpack.c.b16 %v476, %v470
      %v489 = vpack.c.b16 %v477, %v471
      %v490 = vpack.c.b16 %v478, %v472
      %v491 = vpack.c.b16 %v479, %v473
      %v492 = vpack.c.b16 %v480, %v474
      %v601 = vunpack.c.l.b16 %v345
      %v602 = vunpack.c.l.b16 %v346
      %v603 = vunpack.c.l.b16 %v347
      %v604 = vunpack.c.l.b16 %v348
      %v605 = vunpack.c.l.b16 %v349
      %v606 = vunpack.c.l.b16 %v350
      %v607 = vunpack.c.l.b16 %v351
      %v608 = vunpack.c.l.b16 %v352
      %v609 = vunpack.c.l.b16 %v353
      %v610 = vunpack.c.l.b16 %v354
      %v611 = vunpack.c.l.b16 %v355
      %v612 = vunpack.c.l.b16 %v356
      %v613 = vunpack.c.l.b16 %v357
      %v614 = vunpack.c.l.b16 %v358
      %v615 = vunpack.c.l.b16 %v359
      %v616 = vunpack.c.l.b16 %v360
      %v617 = vunpack.c.l.b16 %v361
      %v618 = vunpack.c.l.b16 %v362
      %v619 = vunpack.c.l.b16 %v363
      %v620 = vunpack.c.l.b16 %v364
      %v621 = vunpack.c.l.b16 %v365
      %v622 = vunpack.c.l.b16 %v366
      %v623 = vunpack.c.l.b16 %v367
      %v624 = vunpack.c.l.b16 %v368
      %v625 = vunpack.c.l.b16 %v369
      %v626 = vunpack.c.l.b16 %v370
      %v627 = vunpack.c.l.b16 %v371
      %v628 = vunpack.c.l.b16 %v372
      %v629 = vunpack.c.l.b16 %v373
      %v630 = vunpack.c.l.b16 %v374
      %v631 = vunpack.c.l.b16 %v375
      %v632 = vunpack.c.l.b16 %v376
      %v633 = vunpack.c.l.b16 %v377
      %v634 = vunpack.c.l.b16 %v378
      %v635 = vunpack.c.l.b16 %v379
      %v636 = vunpack.c.l.b16 %v380
      %v637 = vunpack.c.l.b16 %v381
      %v638 = vunpack.c.l.b16 %v382
      %v639 = vunpack.c.l.b16 %v383
      %v640 = vunpack.c.l.b16 %v384
      %v641 = vunpack.c.l.b16 %v385
      %v642 = vunpack.c.l.b16 %v386
      %v643 = vunpack.c.l.b16 %v387
      %v644 = vunpack.c.l.b16 %v388
      %v645 = vunpack.c.l.b16 %v389
      %v646 = vunpack.c.l.b16 %v390
      %v647 = vunpack.c.l.b16 %v391
      %v648 = vunpack.c.l.b16 %v392
      %v649 = vunpack.c.l.b16 %v393
      %v650 = vunpack.c.l.b16 %v394
      %v651 = vunpack.c.l.b16 %v395
      %v652 = vunpack.c.l.b16 %v396
      %v653 = vunpack.c.l.b16 %v397
      %v654 = vunpack.c.l.b16 %v398
      %v655 = vunpack.c.l.b16 %v399
      %v656 = vunpack.c.l.b16 %v400
      %v657 = vunpack.c.l.b16 %v401
      %v658 = vunpack.c.l.b16 %v402
      %v659 = vunpack.c.l.b16 %v403
      %v660 = vunpack.c.l.b16 %v404
      %v661 = vunpack.c.l.b16 %v405
      %v662 = vunpack.c.l.b16 %v406
      %v663 = vunpack.c.l.b16 %v407
      %v664 = vunpack.c.l.b16 %v408
      %v665 = vunpack.c.l.b16 %v409
      %v666 = vunpack.c.l.b16 %v410
      %v667 = vunpack.c.l.b16 %v411
      %v668 = vunpack.c.l.b16 %v412
      %v669 = vunpack.c.l.b16 %v413
      %v670 = vunpack.c.l.b16 %v414
      %v671 = vunpack.c.l.b16 %v415
      %v672 = vunpack.c.l.b16 %v416
      %v673 = vunpack.c.l.b16 %v417
      %v674 = vunpack.c.l.b16 %v418
      %v675 = vunpack.c.l.b16 %v419
      %v676 = vunpack.c.l.b16 %v420
      %v677 = vunpack.c.l.b16 %v421
      %v678 = vunpack.c.l.b16 %v422
      %v679 = vunpack.c.l.b16 %v423
      %v680 = vunpack.c.l.b16 %v424
      %v681 = vunpack.c.l.b16 %v425
      %v682 = vunpack.c.l.b16 %v426
      %v683 = vunpack.c.l.b16 %v427
      %v684 = vunpack.c.l.b16 %v428
      %v685 = vunpack.c.l.b16 %v429
      %v686 = vunpack.c.l.b16 %v430
      %v687 = vunpack.c.l.b16 %v431
      %v688 = vunpack.c.l.b16 %v432
      %v689 = vunpack.c.l.b16 %v433
      %v690 = vunpack.c.l.b16 %v434
      %v691 = vunpack.c.l.b16 %v435
      %v692 = vunpack.c.l.b16 %v436
      %v693 = vunpack.c.l.b16 %v437
      %v694 = vunpack.c.l.b16 %v438
      %v695 = vunpack.c.l.b16 %v439
      %v696 = vunpack.c.l.b16 %v440
      %v697 = vpack.c.b16 %v602, %v601
      %v698 = vpack.c.b16 %v604, %v603
      %v699 = vpack.c.b16 %v606, %v605
      %v700 = vpack.c.b16 %v608, %v607
      %v701 = vpack.c.b16 %v610, %v609
      %v702 = vpack.c.b16 %v612, %v611
      %v703 = vpack.c.b16 %v614, %v613
      %v704 = vpack.c.b16 %v616, %v615
      %v705 = vpack.c.b16 %v618, %v617
      %v706 = vpack.c.b16 %v620, %v619
      %v707 = vpack.c.b16 %v622, %v621
      %v708 = vpack.c.b16 %v624, %v623
      %v709 = vpack.c.b16 %v626, %v625
      %v710 = vpack.c.b16 %v628, %v627
      %v711 = vpack.c.b16 %v630, %v629
      %v712 = vpack.c.b16 %v632, %v631
      %v713 = vpack.c.b16 %v634, %v633
      %v714 = vpack.c.b16 %v636, %v635
      %v715 = vpack.c.b16 %v638, %v637
      %v716 = vpack.c.b16 %v640, %v639
      %v717 = vpack.c.b16 %v642, %v641
      %v718 = vpack.c.b16 %v644, %v643
      %v719 = vpack.c.b16 %v646, %v645
      %v720 = vpack.c.b16 %v648, %v647
      %v721 = vpack.c.b16 %v650, %v649
      %v722 = vpack.c.b16 %v652, %v651
      %v723 = vpack.c.b16 %v654, %v653
      %v724 = vpack.c.b16 %v656, %v655
      %v725 = vpack.c.b16 %v658, %v657
      %v726 = vpack.c.b16 %v660, %v659
      %v727 = vpack.c.b16 %v662, %v661
      %v728 = vpack.c.b16 %v664, %v663
      %v729 = vpack.c.b16 %v666, %v665
      %v730 = vpack.c.b16 %v668, %v667
      %v731 = vpack.c.b16 %v670, %v669
      %v732 = vpack.c.b16 %v672, %v671
      %v733 = vpack.c.b16 %v674, %v673
      %v734 = vpack.c.b16 %v676, %v675
      %v735 = vpack.c.b16 %v678, %v677
      %v736 = vpack.c.b16 %v680, %v679
      %v737 = vpack.c.b16 %v682, %v681
      %v738 = vpack.c.b16 %v684, %v683
      %v739 = vpack.c.b16 %v686, %v685
      %v740 = vpack.c.b16 %v688, %v687
      %v741 = vpack.c.b16 %v690, %v689
      %v742 = vpack.c.b16 %v692, %v691
      %v743 = vpack.c.b16 %v694, %v693
      %v744 = vpack.c.b16 %v696, %v695
      %793 = vmatpush.bf16.msra.mxu0 %v704
      %794 = vmatpush.bf16.msra.mxu0 %v703
      %795 = vmatpush.bf16.msra.mxu0 %v702
      %796 = vmatpush.bf16.msra.mxu0 %v701
      %797 = vmatpush.bf16.msra.mxu0 %v700
      %798 = vmatpush.bf16.msra.mxu0 %v699
      %799 = vmatpush.bf16.msra.mxu0 %v698
      %800 = vmatpush.bf16.msra.mxu0 %v697
      %801 = vmatmul.bf16.gmra.mxu0 %v481
      %v802 = vpop.f32.mrf.mxu0
      %v803 = vadd.f32 %v443, %v802
      %v804 = vpop.f32.mrf.mxu0
      %v805 = vadd.f32 %v443, %v804
      %806 = vmatmul.bf16.gmra.mxu0 %v487
      %v807 = vpop.f32.mrf.mxu0
      %v808 = vadd.f32 %v443, %v807
      %v809 = vpop.f32.mrf.mxu0
      %v810 = vadd.f32 %v443, %v809
      %811 = vdwg.mxu0
      %812 = vmatpush.bf16.msra.mxu0 %v712
      %813 = vmatpush.bf16.msra.mxu0 %v711
      %814 = vmatpush.bf16.msra.mxu0 %v710
      %815 = vmatpush.bf16.msra.mxu0 %v709
      %816 = vmatpush.bf16.msra.mxu0 %v708
      %817 = vmatpush.bf16.msra.mxu0 %v707
      %818 = vmatpush.bf16.msra.mxu0 %v706
      %819 = vmatpush.bf16.msra.mxu0 %v705
      %820 = vmatmul.bf16.gmra.mxu0 %v482
      %v821 = vpop.f32.mrf.mxu0
      %v822 = vadd.f32 %v803, %v821
      %v823 = vpop.f32.mrf.mxu0
      %v824 = vadd.f32 %v805, %v823
      %825 = vmatmul.bf16.gmra.mxu0 %v488
      %v826 = vpop.f32.mrf.mxu0
      %v827 = vadd.f32 %v808, %v826
      %v828 = vpop.f32.mrf.mxu0
      %v829 = vadd.f32 %v810, %v828
      %830 = vdwg.mxu0
      %831 = vmatpush.bf16.msra.mxu0 %v720
      %832 = vmatpush.bf16.msra.mxu0 %v719
      %833 = vmatpush.bf16.msra.mxu0 %v718
      %834 = vmatpush.bf16.msra.mxu0 %v717
      %835 = vmatpush.bf16.msra.mxu0 %v716
      %836 = vmatpush.bf16.msra.mxu0 %v715
      %837 = vmatpush.bf16.msra.mxu0 %v714
      %838 = vmatpush.bf16.msra.mxu0 %v713
      %839 = vmatmul.bf16.gmra.mxu0 %v483
      %v840 = vpop.f32.mrf.mxu0
      %v841 = vadd.f32 %v822, %v840
      %v842 = vpop.f32.mrf.mxu0
      %v843 = vadd.f32 %v824, %v842
      %844 = vmatmul.bf16.gmra.mxu0 %v489
      %v845 = vpop.f32.mrf.mxu0
      %v846 = vadd.f32 %v827, %v845
      %v847 = vpop.f32.mrf.mxu0
      %v848 = vadd.f32 %v829, %v847
      %849 = vdwg.mxu0
      %850 = vmatpush.bf16.msra.mxu0 %v728
      %851 = vmatpush.bf16.msra.mxu0 %v727
      %852 = vmatpush.bf16.msra.mxu0 %v726
      %853 = vmatpush.bf16.msra.mxu0 %v725
      %854 = vmatpush.bf16.msra.mxu0 %v724
      %855 = vmatpush.bf16.msra.mxu0 %v723
      %856 = vmatpush.bf16.msra.mxu0 %v722
      %857 = vmatpush.bf16.msra.mxu0 %v721
      %858 = vmatmul.bf16.gmra.mxu0 %v484
      %v859 = vpop.f32.mrf.mxu0
      %v860 = vadd.f32 %v841, %v859
      %v861 = vpop.f32.mrf.mxu0
      %v862 = vadd.f32 %v843, %v861
      %863 = vmatmul.bf16.gmra.mxu0 %v490
      %v864 = vpop.f32.mrf.mxu0
      %v865 = vadd.f32 %v846, %v864
      %v866 = vpop.f32.mrf.mxu0
      %v867 = vadd.f32 %v848, %v866
      %868 = vdwg.mxu0
      %869 = vmatpush.bf16.msra.mxu0 %v736
      %870 = vmatpush.bf16.msra.mxu0 %v735
      %871 = vmatpush.bf16.msra.mxu0 %v734
      %872 = vmatpush.bf16.msra.mxu0 %v733
      %873 = vmatpush.bf16.msra.mxu0 %v732
      %874 = vmatpush.bf16.msra.mxu0 %v731
      %875 = vmatpush.bf16.msra.mxu0 %v730
      %876 = vmatpush.bf16.msra.mxu0 %v729
      %877 = vmatmul.bf16.gmra.mxu0 %v485
      %v878 = vpop.f32.mrf.mxu0
      %v879 = vadd.f32 %v860, %v878
      %v880 = vpop.f32.mrf.mxu0
      %v881 = vadd.f32 %v862, %v880
      %882 = vmatmul.bf16.gmra.mxu0 %v491
      %v883 = vpop.f32.mrf.mxu0
      %v884 = vadd.f32 %v865, %v883
      %v885 = vpop.f32.mrf.mxu0
      %v886 = vadd.f32 %v867, %v885
      %887 = vdwg.mxu0
      %888 = vmatpush.bf16.msra.mxu0 %v744
      %889 = vmatpush.bf16.msra.mxu0 %v743
      %890 = vmatpush.bf16.msra.mxu0 %v742
      %891 = vmatpush.bf16.msra.mxu0 %v741
      %892 = vmatpush.bf16.msra.mxu0 %v740
      %893 = vmatpush.bf16.msra.mxu0 %v739
      %894 = vmatpush.bf16.msra.mxu0 %v738
      %895 = vmatpush.bf16.msra.mxu0 %v737
      %896 = vmatmul.bf16.gmra.mxu0 %v486
      %v897 = vpop.f32.mrf.mxu0
      %v898 = vadd.f32 %v879, %v897
      %v899 = vpop.f32.mrf.mxu0
      %v900 = vadd.f32 %v881, %v899
      %901 = vmatmul.bf16.gmra.mxu0 %v492
      %v902 = vpop.f32.mrf.mxu0
      %v903 = vadd.f32 %v884, %v902
      %v904 = vpop.f32.mrf.mxu0
      %v905 = vadd.f32 %v886, %v904
      %906 = vdwg.mxu0
      %v907 = vld [vmem:[%s3] sm:$0xff]
      %v908 = vld [vmem:[%s3 + $0x8] sm:$0xff]
      %v909 = vld [vmem:[%s3 + $0x10] sm:$0xff]
      %v910 = vld [vmem:[%s3 + $0x18] sm:$0xff]
      %v911 = vadd.f32 %v898, %v907
      %v912 = vadd.f32 %v900, %v908
      %v913 = vadd.f32 %v903, %v909
      %v914 = vadd.f32 %v905, %v910
      %915 = vadd.xlane.f32.xlu0 %v911
      %v916 = vpop.xlane.xlu0 %915
      %917 = vadd.xlane.f32.xlu0 %v912
      %v918 = vpop.xlane.xlu0 %917
      %919 = vadd.xlane.f32.xlu0 %v913
      %v920 = vpop.xlane.xlu0 %919
      %921 = vadd.xlane.f32.xlu0 %v914
      %v922 = vpop.xlane.xlu0 %921
      %v923 = vrcp.pop 128.0
      %v924 = vmul.f32 128.0, %v923
      %v925 = vsub.f32 1.0, %v924
      %v926 = vmul.f32 %v923, %v925
      %v927 = vadd.f32 %v923, %v926
      %vm928 = vweird.f32 %v923
      %v929 = vsel %vm928, %v923, %v927
      %v930 = vmul.f32 %v916, %v929
      %v931 = vmul.f32 %v918, %v929
      %v932 = vmul.f32 %v920, %v929
      %v933 = vmul.f32 %v922, %v929
      %v934 = vsub.f32 %v911, %v930
      %v935 = vsub.f32 %v912, %v931
      %v936 = vsub.f32 %v913, %v932
      %v937 = vsub.f32 %v914, %v933
      %v938 = vmul.f32 %v934, %v934
      %v939 = vmul.f32 %v935, %v935
      %v940 = vmul.f32 %v936, %v936
      %v941 = vmul.f32 %v937, %v937
      %942 = vadd.xlane.f32.xlu0 %v938
      %v943 = vpop.xlane.xlu0 %942
      %944 = vadd.xlane.f32.xlu0 %v939
      %v945 = vpop.xlane.xlu0 %944
      %946 = vadd.xlane.f32.xlu0 %v940
      %v947 = vpop.xlane.xlu0 %946
      %948 = vadd.xlane.f32.xlu0 %v941
      %v949 = vpop.xlane.xlu0 %948
      %v950 = vmul.f32 %v943, %v929
      %v951 = vmul.f32 %v945, %v929
      %v952 = vmul.f32 %v947, %v929
      %v953 = vmul.f32 %v949, %v929
      %v954 = vadd.f32 %v950, 1e-05
      %v955 = vadd.f32 %v951, 1e-05
      %v956 = vadd.f32 %v952, 1e-05
      %v957 = vadd.f32 %v953, 1e-05
      %v958 = vrsqrt.pop %v954
      %v959 = vmul.f32 %v958, %v954
      %v960 = vmul.f32 %v959, %v958
      %v961 = vmul.f32 0.5, %v960
      %v962 = vsub.f32 1.5, %v961
      %v963 = vmul.f32 %v958, %v962
      %vm964 = vweird.f32 %v954
      %vm965 = vweird.f32 %v958
      %vm966 = vmor %vm964, %vm965
      %v967 = vsel %vm966, %v958, %v963
      %v968 = vrsqrt.pop %v955
      %v969 = vmul.f32 %v968, %v955
      %v970 = vmul.f32 %v969, %v968
      %v971 = vmul.f32 0.5, %v970
      %v972 = vsub.f32 1.5, %v971
      %v973 = vmul.f32 %v968, %v972
      %vm974 = vweird.f32 %v955
      %vm975 = vweird.f32 %v968
      %vm976 = vmor %vm974, %vm975
      %v977 = vsel %vm976, %v968, %v973
      %v978 = vrsqrt.pop %v956
      %v979 = vmul.f32 %v978, %v956
      %v980 = vmul.f32 %v979, %v978
      %v981 = vmul.f32 0.5, %v980
      %v982 = vsub.f32 1.5, %v981
      %v983 = vmul.f32 %v978, %v982
      %vm984 = vweird.f32 %v956
      %vm985 = vweird.f32 %v978
      %vm986 = vmor %vm984, %vm985
      %v987 = vsel %vm986, %v978, %v983
      %v988 = vrsqrt.pop %v957
      %v989 = vmul.f32 %v988, %v957
      %v990 = vmul.f32 %v989, %v988
      %v991 = vmul.f32 0.5, %v990
      %v992 = vsub.f32 1.5, %v991
      %v993 = vmul.f32 %v988, %v992
      %vm994 = vweird.f32 %v957
      %vm995 = vweird.f32 %v988
      %vm996 = vmor %vm994, %vm995
      %v997 = vsel %vm996, %v988, %v993
      %v998 = vmul.f32 %v934, %v967
      %v999 = vmul.f32 %v935, %v977
      %v1000 = vmul.f32 %v936, %v987
      %v1001 = vmul.f32 %v937, %v997
      %v1002 = vld [vmem:[%s4] sm:$0x1]
      %v1004 = vperm.slane %v1002, 0
      %v1006 = vmul.f32 %v998, %v1004
      %v1007 = vmul.f32 %v999, %v1004
      %v1008 = vmul.f32 %v1000, %v1004
      %v1009 = vmul.f32 %v1001, %v1004
      %v1010 = vld [vmem:[%s5] sm:$0x1]
      %v1012 = vperm.slane %v1010, 0
      %v1014 = vadd.f32 %v1006, %v1012
      %v1015 = vadd.f32 %v1007, %v1012
      %v1016 = vadd.f32 %v1008, %v1012
      %v1017 = vadd.f32 %v1009, %v1012
      %v1018 = vpack.c.bf16 %v1015, %v1014
      %v1019 = vpack.c.bf16 %v1017, %v1016
      %v1020 = vld [vmem:[%s6] sm:$0xf]
      %v1021 = vld [vmem:[%s6 + $0x4] sm:$0xf]
      %v1022 = vld [vmem:[%s6 + $0x8] sm:$0xf]
      %v1023 = vld [vmem:[%s6 + $0xc] sm:$0xf]
      %v1024 = vld [vmem:[%s6 + $0x10] sm:$0xf]
      %v1025 = vld [vmem:[%s6 + $0x14] sm:$0xf]
      %v1026 = vld [vmem:[%s6 + $0x18] sm:$0xf]
      %v1027 = vld [vmem:[%s6 + $0x1c] sm:$0xf]
      %v1028 = vld [vmem:[%s6 + $0x20] sm:$0xf]
      %v1029 = vld [vmem:[%s6 + $0x24] sm:$0xf]
      %v1030 = vld [vmem:[%s6 + $0x28] sm:$0xf]
      %v1031 = vld [vmem:[%s6 + $0x2c] sm:$0xf]
      %v1032 = vld [vmem:[%s6 + $0x30] sm:$0xf]
      %v1033 = vld [vmem:[%s6 + $0x34] sm:$0xf]
      %v1034 = vld [vmem:[%s6 + $0x38] sm:$0xf]
      %v1035 = vld [vmem:[%s6 + $0x3c] sm:$0xf]
      %v1036 = vld [vmem:[%s7] sm:$0x1]
      %v1038 = vperm.slane %v1036, 0
      %v1056 = vunpack.c.l.b16 %v1020
      %v1057 = vunpack.c.l.b16 %v1021
      %v1058 = vunpack.c.l.b16 %v1022
      %v1059 = vunpack.c.l.b16 %v1023
      %v1060 = vunpack.c.l.b16 %v1024
      %v1061 = vunpack.c.l.b16 %v1025
      %v1062 = vunpack.c.l.b16 %v1026
      %v1063 = vunpack.c.l.b16 %v1027
      %v1064 = vunpack.c.l.b16 %v1028
      %v1065 = vunpack.c.l.b16 %v1029
      %v1066 = vunpack.c.l.b16 %v1030
      %v1067 = vunpack.c.l.b16 %v1031
      %v1068 = vunpack.c.l.b16 %v1032
      %v1069 = vunpack.c.l.b16 %v1033
      %v1070 = vunpack.c.l.b16 %v1034
      %v1071 = vunpack.c.l.b16 %v1035
      %v1072 = vpack.c.b16 %v1057, %v1056
      %v1073 = vpack.c.b16 %v1059, %v1058
      %v1074 = vpack.c.b16 %v1061, %v1060
      %v1075 = vpack.c.b16 %v1063, %v1062
      %v1076 = vpack.c.b16 %v1065, %v1064
      %v1077 = vpack.c.b16 %v1067, %v1066
      %v1078 = vpack.c.b16 %v1069, %v1068
      %v1079 = vpack.c.b16 %v1071, %v1070
      %1088 = vmatpush.bf16.msra.mxu0 %v1079
      %1089 = vmatpush.bf16.msra.mxu0 %v1078
      %1090 = vmatpush.bf16.msra.mxu0 %v1077
      %1091 = vmatpush.bf16.msra.mxu0 %v1076
      %1092 = vmatpush.bf16.msra.mxu0 %v1075
      %1093 = vmatpush.bf16.msra.mxu0 %v1074
      %1094 = vmatpush.bf16.msra.mxu0 %v1073
      %1095 = vmatpush.bf16.msra.mxu0 %v1072
      %1096 = vmatmul.bf16.gmra.mxu0 %v1018
      %v1097 = vpop.f32.mrf.mxu0
      %v1098 = vadd.f32 %v1038, %v1097
      %v1099 = vpop.f32.mrf.mxu0
      %v1100 = vadd.f32 %v1038, %v1099
      %1101 = vmatmul.bf16.gmra.mxu0 %v1019
      %v1102 = vpop.f32.mrf.mxu0
      %v1103 = vadd.f32 %v1038, %v1102
      %v1104 = vpop.f32.mrf.mxu0
      %v1105 = vadd.f32 %v1038, %v1104
      %1106 = vdwg.mxu0
      %v1107 = vld [vmem:[%s8] sm:$0xff]
      %v1108 = vld [vmem:[%s8 + $0x8] sm:$0xff]
      %v1109 = vld [vmem:[%s8 + $0x10] sm:$0xff]
      %v1110 = vld [vmem:[%s8 + $0x18] sm:$0xff]
      %v1111 = vadd.f32 %v1098, %v1107
      %v1112 = vadd.f32 %v1100, %v1108
      %v1113 = vadd.f32 %v1103, %v1109
      %v1114 = vadd.f32 %v1105, %v1110
      %v1115 = vpack.c.bf16 %v1111, %v1111
      %v1116 = vpack.c.bf16 %v1112, %v1112
      %v1117 = vpack.c.bf16 %v1113, %v1113
      %v1118 = vpack.c.bf16 %v1114, %v1114
      %1119 = vst [vmem:[%s332] sm:$0xf] %v1115
      %1120 = vst [vmem:[%s332 + $0x4] sm:$0xf] %v1116
      %1121 = vst [vmem:[%s332 + $0x8] sm:$0xf] %v1117
      %1122 = vst [vmem:[%s332 + $0xc] sm:$0xf] %v1118
      %p1123 = scmp.lt.s32.totalorder %s20, 1
      %s1124 = scalar_select %p1123, %s20, 1
      %s1125 = smul.addr %s1124, 4
      %s1126 = smul.addr %s1125, 4
      %s1127 = scalar_lea.vmem %s9, %s1126
      // Predicated region
      $region57: #{mae_forward.2} parent=55 // pred_check
        %p1128 = pneg %p232
      $region58: #{mae_forward.2} parent=55 // pred_check_branch
        %1130 = sbr.rel (%p1128) target = $region60
      $region59: #{mae_forward.2} parent=55 // pred_region
        _
      $region60: #{mae_forward.2} parent=55 // pred_fallthru
        _
    $region56: #{mae_forward.2} parent=5 // pred_fallthru
      _
    %p1131 = scmp.le.s32.totalorder 2, %s15
    // Predicated region
    $region61: #{mae_forward.2} parent=5 // pred_check
      %p1132 = pneg %p1131
    $region62: #{mae_forward.2} parent=5 // pred_check_branch
      %1134 = sbr.rel (%p1132) target = $region64
    $region63: #{mae_forward.2} parent=5 // pred_region
      %s1135 = ssub.s32 %s15, 2
      // Predicated region
      $region65: #{mae_forward.2} parent=63 // pred_check
        %p1136 = pneg %p238
      $region66: #{mae_forward.2} parent=63 // pred_check_branch
        %1138 = sbr.rel (%p1136) target = $region68
      $region67: #{mae_forward.2} parent=63 // pred_region
        %p1139 = scmp.lt.s32.totalorder %s21, 1
        %s1140 = scalar_select %p1139, %s21, 1
        %s1141 = smul.addr %s1140, 4
        %s1142 = smul.addr %s1141, 4
        %s1143 = scalar_lea.vmem %s9, %s1142
      $region68: #{mae_forward.2} parent=63 // pred_fallthru
        _
    $region64: #{mae_forward.2} parent=5 // pred_fallthru
      _
  $region6: #{mae_forward.2} parent=0 // loop_footer
    %s19 = sadd.s32 1, %s15
  $region7: #{mae_forward.2} parent=0 // loop_footer_branch
    %14 = sbr.rel target = $region3
  $region8: #{mae_forward.2} parent=0 // loop_exit
    _

</llo_original>
